<compile_context>
chip_gen: v5e
topology: v5e:2x2
jax: 0.10.0
libtpu: 0.0.40
codegen_flags: <defaults>
</compile_context>

<pallas_src>
import functools
import numpy as np
import jax
import jax.numpy as jnp
from jax.experimental import pallas as pl
from jax.experimental.pallas import tpu as pltpu


# ----------------------- synthetic config (mirrors PoseRefine.__init__) -------
NUM_JOINTS = 8          # len(part_labels)
INPUT_CHANNELS = 32     # input_channels / feat_dim (small for the demo)
NUM_LAYERS = 2          # cfg.REFINE.NUM_LAYERS
BN_EPS = 1e-5
OUT_PAD = 128           # lane-dense output width (>= 2*NUM_JOINTS)

# synthetic skeleton standing in for VIS_CONFIG[dataset]
PART_LABELS = ['nose', 'neck', 'sho', 'elb', 'wri', 'hip', 'kne', 'ank']
PART_IDX = {p: i for i, p in enumerate(PART_LABELS)}
PART_ORDERS = [('nose', 'neck'), ('neck', 'sho'), ('sho', 'elb'),
               ('elb', 'wri'), ('neck', 'hip'), ('hip', 'kne'), ('kne', 'ank')]


def build_graph():
    """Same math as PoseRefine.build_graph: D^-1/2 (I + A) D^-1/2."""
    g = np.eye(len(PART_LABELS), dtype=np.float32)
    for i, part in enumerate(PART_LABELS):
        for p1, p2 in PART_ORDERS:
            if p1 == part:
                g[i, PART_IDX[p2]] = 1.0
            if p2 == part:
                g[i, PART_IDX[p1]] = 1.0
    rowsum = g.sum(1)
    r_inv_sqrt = np.power(rowsum, -0.5)
    r_inv_sqrt[np.isinf(r_inv_sqrt)] = 0.0
    d = np.diag(r_inv_sqrt).astype(np.float32)
    return jnp.asarray(d @ g @ d, dtype=jnp.float32)


# ----------------------- sampling (gather glue, plain JAX) --------------------
def float_sample(features, coords):
    """Bilinear sample NCHW features at float (x, y) pixel coords.
    features: (B, C, H, W); coords: (B, P, J, 2) -> (B, P, J, C)."""
    B, C, H, W = features.shape
    _, P, J, _ = coords.shape
    feat_flat = features.reshape(B, C, H * W).transpose(0, 2, 1)  # (B, HW, C)
    x = coords[..., 0]
    y = coords[..., 1]
    x0 = jnp.floor(x)
    y0 = jnp.floor(y)
    x1 = x0 + 1.0
    y1 = y0 + 1.0
    wx1 = x - x0
    wx0 = 1.0 - wx1
    wy1 = y - y0
    wy0 = 1.0 - wy1

    def gather(yy, xx):
        yy = jnp.clip(yy, 0, H - 1).astype(jnp.int32)
        xx = jnp.clip(xx, 0, W - 1).astype(jnp.int32)
        idx = (yy * W + xx).reshape(B, -1)                          # (B, P*J)
        v = jnp.take_along_axis(feat_flat, idx[..., None], axis=1)  # (B, P*J, C)
        return v.reshape(B, P, J, C)

    out = (wy0[..., None] * wx0[..., None] * gather(y0, x0)
           + wy0[..., None] * wx1[..., None] * gather(y0, x1)
           + wy1[..., None] * wx0[..., None] * gather(y1, x0)
           + wy1[..., None] * wx1[..., None] * gather(y1, x1))
    return out


def int_sample(features, center_ind):
    """Sample NCHW features at flat integer spatial indices.
    features: (B, C, H, W); center_ind: (B, P) -> (B, P, C)."""
    B, C, H, W = features.shape
    feat_flat = features.reshape(B, C, H * W).transpose(0, 2, 1)  # (B, HW, C)
    idx = center_ind.astype(jnp.int32)[..., None]                 # (B, P, 1)
    return jnp.take_along_axis(feat_flat, idx, axis=1)            # (B, P, C)


# ----------------------- fused Pallas kernel ----------------------------------
def pose_refine_kernel(xj_ref, xc_ref,
                       wh_ref, bh_ref,
                       w1s_ref, b1s_ref, w2s_ref, b2s_ref,
                       m1_ref,
                       pw1b_ref, pw1c_ref, pb1_ref,
                       pw2_ref, pb2_ref,
                       o_ref):
    C = xc_ref.shape[1]
    x = xj_ref[...]                                   # (T, J*C) bf16 joint feats

    def gconv(v, w, b):
        # adj folded into w as kron(adj^T, W); eval-BN folded into (w, b).
        # bf16 operands, f32 MXU accumulation; bias + ReLU on the VPU in f32.
        y = jnp.dot(v.astype(jnp.bfloat16), w,
                    preferred_element_type=jnp.float32) + b
        return jnp.maximum(y, 0.0)

    # BasicGraphBlock head
    feats = gconv(x, wh_ref[...], bh_ref[...])        # (T, J*C) f32
    # ResGraphBlock layers (static unroll, NUM_LAYERS is small)
    for l in range(w1s_ref.shape[0]):
        y = gconv(feats, w1s_ref[l], b1s_ref[l])
        y = gconv(y, w2s_ref[l], b2s_ref[l])
        feats = feats + y

    # mean-over-joints path folded host-side: m1 = m_mean @ pw1a  ->  feats @ m1
    h = jnp.dot(feats.astype(jnp.bfloat16), m1_ref[...],
                preferred_element_type=jnp.float32)   # (T, C)

    # max-over-joints: log-depth halving tree over lane-contiguous joint blocks
    fmax = feats
    while fmax.shape[1] > C and fmax.shape[1] % (2 * C) == 0:
        half = fmax.shape[1] // 2
        fmax = jnp.maximum(fmax[:, :half], fmax[:, half:])
    fm = fmax[:, :C]
    for j in range(1, fmax.shape[1] // C):            # tail (empty when J is pow2)
        fm = jnp.maximum(fm, fmax[:, j * C:(j + 1) * C])

    # gconv_pred: pw1 split over {mean(folded), max, center} -> no in-kernel concat
    h = h + jnp.dot(fm.astype(jnp.bfloat16), pw1b_ref[...],
                    preferred_element_type=jnp.float32)
    h = h + jnp.dot(xc_ref[...], pw1c_ref[...],
                    preferred_element_type=jnp.float32)
    h = jnp.maximum(h + pb1_ref[...], 0.0)            # (T, C) f32

    # second 1x1 conv, zero-padded to 128 lanes -> lane-dense (unmasked) store
    o_ref[...] = (jnp.dot(h.astype(jnp.bfloat16), pw2_ref[...],
                          preferred_element_type=jnp.float32) + pb2_ref[...])


def _round_up(x, m):
    return ((x + m - 1) // m) * m


def run_pose_refine(params, feat_joints_flat, feat_center, *, tile_bp=1024):
    BP, JC = feat_joints_flat.shape
    C = feat_center.shape[1]
    L = params['w1s_eff'].shape[0]

    # Row tile: multiple of 16 (bf16 sublane pack).  Pad BP up to a whole number
    # of tiles so every grid step sees a full block; padded rows are sliced off.
    tile = _round_up(min(tile_bp, BP), 16)
    bp_pad = _round_up(BP, tile)
    xj = jnp.pad(feat_joints_flat, ((0, bp_pad - BP), (0, 0))).astype(jnp.bfloat16)
    xc = jnp.pad(feat_center, ((0, bp_pad - BP), (0, 0))).astype(jnp.bfloat16)

    def resident(shape):
        # weight blocks: index_map pinned to block 0 -> DMA'd once, VMEM-resident
        zeros = (0,) * len(shape)
        return pl.BlockSpec(shape, lambda i, _z=zeros: _z)

    out = pl.pallas_call(
        pose_refine_kernel,
        out_shape=jax.ShapeDtypeStruct((bp_pad, OUT_PAD), jnp.float32),
        grid=(bp_pad // tile,),
        in_specs=[
            pl.BlockSpec((tile, JC), lambda i: (i, 0)),   # streamed joint feats
            pl.BlockSpec((tile, C), lambda i: (i, 0)),    # streamed center feats
            resident((JC, JC)),                           # head kron weight (bf16)
            resident((1, JC)),                            # head bias (f32)
            resident((L, JC, JC)),                        # res gconv1 weights (bf16)
            resident((L, 1, JC)),
            resident((L, JC, JC)),                        # res gconv2 weights (bf16)
            resident((L, 1, JC)),
            resident((JC, C)),                            # mean fold m1 (bf16)
            resident((C, C)),                             # pw1 (max part, bf16)
            resident((C, C)),                             # pw1 (center part, bf16)
            resident((1, C)),                             # pb1 (f32)
            resident((C, OUT_PAD)),                       # pw2 lane-padded (bf16)
            resident((1, OUT_PAD)),                       # pb2 lane-padded (f32)
        ],
        out_specs=pl.BlockSpec((tile, OUT_PAD), lambda i: (i, 0)),
        compiler_params=pltpu.CompilerParams(
            # BP tiles are independent: split across both v7x TensorCores.
            dimension_semantics=("parallel",)),
    )(xj, xc,
      params['wh_eff'], params['bh_eff'],
      params['w1s_eff'], params['b1s_eff'],
      params['w2s_eff'], params['b2s_eff'],
      params['m1'],
      params['pw1b'], params['pw1c'], params['pb1'],
      params['pw2_pad'], params['pb2_pad'])
    return out[:BP]


# ----------------------- PoseRefine.forward ----------------------------------
def pose_refine_forward(params, features, coords, center_ind, tile_bp=1024):
    B, C, H, W = features.shape
    _, P, J, _ = coords.shape
    feat_joints = float_sample(features, coords)            # (B, P, J, C)
    feat_center = int_sample(features, center_ind)          # (B, P, C)

    feats_flat = feat_joints.reshape(B * P, J * C)          # row-major: j*C + c
    out = run_pose_refine(params, feats_flat,
                          feat_center.reshape(B * P, C),
                          tile_bp=tile_bp)                  # (B*P, OUT_PAD)
    refine_offset = out[:, :2 * J]                          # strip lane padding
    return refine_offset.reshape(B, P, 2 * J)


# ----------------------- pure-JAX reference (for sanity check, f32) -----------
def reference_forward(params, features, coords, center_ind):
    B, C, H, W = features.shape
    _, P, J, _ = coords.shape
    feat_joints = float_sample(features, coords).reshape(B * P, J, C)
    feat_center = int_sample(features, center_ind).reshape(B * P, C)
    adj = params['adj']

    def gconv(v, w, b):
        h = jnp.einsum('njc,cd->njd', v, w)
        return jnp.maximum(jnp.einsum('jk,nkc->njc', adj, h) + b, 0.0)

    feats = gconv(feat_joints, params['wh'], params['bh'])
    for l in range(params['w1s'].shape[0]):
        res = feats
        y = gconv(feats, params['w1s'][l], params['b1s'][l])
        y = gconv(y, params['w2s'][l], params['b2s'][l])
        feats = res + y
    feat1 = feats.mean(axis=1)
    feat2 = feats.max(axis=1)
    x = jnp.concatenate([feat1, feat2, feat_center], axis=-1)
    h = jnp.maximum(x @ params['pw1'] + params['pb1'], 0.0)
    out = h @ params['pw2'] + params['pb2']
    return out.reshape(B, P, 2 * J)


# ----------------------- deterministic parameter init -------------------------
def init_params(key):
    C, J, L = INPUT_CHANNELS, NUM_JOINTS, NUM_LAYERS
    keys = iter(jax.random.split(key, 64))

    def dense(cin, cout):
        return (jax.random.normal(next(keys), (cin, cout), jnp.float32)
                / np.sqrt(cin)).astype(jnp.float32)

    def bn_params(c):
        gamma = 1.0 + 0.1 * jax.random.normal(next(keys), (c,), jnp.float32)
        beta = 0.1 * jax.random.normal(next(keys), (c,), jnp.float32)
        mean = 0.1 * jax.random.normal(next(keys), (c,), jnp.float32)
        var = jnp.ones((c,), jnp.float32)
        return gamma, beta, mean, var

    def gconv_folded(cin, cout):
        # GraphConv weight/bias with eval-mode BatchNorm1d folded in.
        w = dense(cin, cout)
        b = 0.1 * jax.random.normal(next(keys), (cout,), jnp.float32)
        gamma, beta, mean, var = bn_params(cout)
        scale = gamma / jnp.sqrt(var + BN_EPS)
        return w * scale[None, :], ((b - mean) * scale + beta)[None, :]

    adj = build_graph()
    params = {'adj': adj}
    params['wh'], params['bh'] = gconv_folded(C, C)           # BasicGraphBlock
    w1s, b1s, w2s, b2s = [], [], [], []
    for _ in range(L):                                        # ResGraphBlocks
        w1, b1 = gconv_folded(C, C)
        w2, b2 = gconv_folded(C, C)
        w1s.append(w1); b1s.append(b1); w2s.append(w2); b2s.append(b2)
    params['w1s'] = jnp.stack(w1s)   # (L, C, C)
    params['b1s'] = jnp.stack(b1s)   # (L, 1, C)
    params['w2s'] = jnp.stack(w2s)
    params['b2s'] = jnp.stack(b2s)

    # gconv_pred: Conv1d(3C, C, 1) + BN + ReLU + Conv1d(C, 2J, 1), BN folded.
    pw1 = dense(3 * C, C)
    pb1 = 0.1 * jax.random.normal(next(keys), (C,), jnp.float32)
    gamma, beta, mean, var = bn_params(C)
    scale = gamma / jnp.sqrt(var + BN_EPS)
    params['pw1'] = pw1 * scale[None, :]
    params['pb1'] = ((pb1 - mean) * scale + beta)[None, :]
    params['pw2'] = dense(C, 2 * J)
    params['pb2'] = (0.1 * jax.random.normal(next(keys), (2 * J,), jnp.float32))[None, :]

    # ---- host-side folds for the fused kernel (heavy weights cast to bf16) ----
    # kron fold: y = relu(adj @ (x@W) + b)  ==  relu(x_flat @ kron(adj^T, W) + tile(b))
    def kron_fold(w, b):
        w_eff = jnp.kron(adj.T, w)                         # (J*C, J*C), f32 fold
        b_eff = jnp.tile(b.reshape(-1), J)[None, :]        # (1, J*C), stays f32
        return w_eff.astype(jnp.bfloat16), b_eff

    params['wh_eff'], params['bh_eff'] = kron_fold(params['wh'], params['bh'])
    w1e, b1e, w2e, b2e = [], [], [], []
    for l in range(L):
        we, be = kron_fold(params['w1s'][l], params['b1s'][l])
        w1e.append(we); b1e.append(be)
        we, be = kron_fold(params['w2s'][l], params['b2s'][l])
        w2e.append(we); b2e.append(be)
    params['w1s_eff'] = jnp.stack(w1e)    # (L, J*C, J*C) bf16
    params['b1s_eff'] = jnp.stack(b1e)    # (L, 1, J*C)  f32
    params['w2s_eff'] = jnp.stack(w2e)
    params['b2s_eff'] = jnp.stack(b2e)

    # mean-over-joints folded directly into pw1's mean slice: m1 = m_mean @ pw1a
    m_mean = jnp.tile(jnp.eye(C, dtype=jnp.float32), (J, 1)) / float(J)   # (J*C, C)
    params['m1'] = (m_mean @ params['pw1'][:C]).astype(jnp.bfloat16)      # (J*C, C)

    # split pw1 over the {max, center} concat pieces (mean piece is folded above)
    params['pw1b'] = params['pw1'][C:2 * C].astype(jnp.bfloat16)
    params['pw1c'] = params['pw1'][2 * C:].astype(jnp.bfloat16)

    # pad pw2 / pb2 out to 128 lanes for a lane-dense (unmasked) output store
    params['pw2_pad'] = jnp.pad(params['pw2'],
                                ((0, 0), (0, OUT_PAD - 2 * J))).astype(jnp.bfloat16)
    params['pb2_pad'] = jnp.pad(params['pb2'], ((0, 0), (0, OUT_PAD - 2 * J)))  # f32
    return params


# ----------------------- main --------------------------------------------------
if __name__ == "__main__":
    B, P, J, C, H, W = 2, 12, NUM_JOINTS, INPUT_CHANNELS, 16, 16
    key = jax.random.PRNGKey(0)
    kf, kc, ki, kp = jax.random.split(key, 4)

    features = jax.random.normal(kf, (B, C, H, W), jnp.float32)           # NCHW like PyTorch
    coords = jax.random.uniform(kc, (B, P, J, 2), jnp.float32) * (W - 1)  # float (x, y) pixels
    center_ind = jax.random.randint(ki, (B, P), 0, H * W)                 # flat spatial indices
    params = init_params(kp)

    # tile_bp=16 exercises the BP grid at demo size (BP=24 -> padded 32 -> 2 tiles);
    # production would use the default (1024 rows/tile, weights stay VMEM-resident).
    fwd = jax.jit(functools.partial(pose_refine_forward, tile_bp=16))
    out = jax.block_until_ready(fwd(params, features, coords, center_ind))

    assert out.shape == (B, P, 2 * J) and out.dtype == jnp.float32
    ref = reference_forward(params, features, coords, center_ind)
    # kernel runs bf16 weights/activations with f32 accumulation vs. an f32 reference
    np.testing.assert_allclose(np.asarray(out), np.asarray(ref), rtol=5e-2, atol=1e-1)
    print("KERNEL_OK")
</pallas_src>

<mosaic_0001>
module attributes {stable_mosaic.version = 11 : i64} {
  func.func @pose_refine_kernel(%arg0: i32, %arg1: memref<16x256xbf16, #tpu.memory_space<vmem>>, %arg2: memref<16x32xbf16, #tpu.memory_space<vmem>>, %arg3: memref<256x256xbf16, #tpu.memory_space<vmem>>, %arg4: memref<1x256xf32, #tpu.memory_space<vmem>>, %arg5: memref<2x256x256xbf16, #tpu.memory_space<vmem>>, %arg6: memref<2x1x256xf32, #tpu.memory_space<vmem>>, %arg7: memref<2x256x256xbf16, #tpu.memory_space<vmem>>, %arg8: memref<2x1x256xf32, #tpu.memory_space<vmem>>, %arg9: memref<256x32xbf16, #tpu.memory_space<vmem>>, %arg10: memref<32x32xbf16, #tpu.memory_space<vmem>>, %arg11: memref<32x32xbf16, #tpu.memory_space<vmem>>, %arg12: memref<1x32xf32, #tpu.memory_space<vmem>>, %arg13: memref<32x128xbf16, #tpu.memory_space<vmem>>, %arg14: memref<1x128xf32, #tpu.memory_space<vmem>>, %arg15: memref<16x128xf32, #tpu.memory_space<vmem>>) attributes {dimension_semantics = [#tpu.dimension_semantics<parallel>], iteration_bounds = array<i64: 2>, scalar_prefetch = 0 : i64, scratch_operands = 0 : i64, tpu.core_type = #tpu.core_type<tc>, window_params = [{transform_indices = @transform_0, window_bounds = array<i64: 16, 256>}, {transform_indices = @transform_1, window_bounds = array<i64: 16, 32>}, {pipeline_mode = #tpu.pipeline_mode<synchronous>, transform_indices = @transform_2, window_bounds = array<i64: 256, 256>}, {pipeline_mode = #tpu.pipeline_mode<synchronous>, transform_indices = @transform_3, window_bounds = array<i64: 1, 256>}, {pipeline_mode = #tpu.pipeline_mode<synchronous>, transform_indices = @transform_4, window_bounds = array<i64: 2, 256, 256>}, {pipeline_mode = #tpu.pipeline_mode<synchronous>, transform_indices = @transform_5, window_bounds = array<i64: 2, 1, 256>}, {pipeline_mode = #tpu.pipeline_mode<synchronous>, transform_indices = @transform_6, window_bounds = array<i64: 2, 256, 256>}, {pipeline_mode = #tpu.pipeline_mode<synchronous>, transform_indices = @transform_7, window_bounds = array<i64: 2, 1, 256>}, {pipeline_mode = #tpu.pipeline_mode<synchronous>, transform_indices = @transform_8, window_bounds = array<i64: 256, 32>}, {pipeline_mode = #tpu.pipeline_mode<synchronous>, transform_indices = @transform_9, window_bounds = array<i64: 32, 32>}, {pipeline_mode = #tpu.pipeline_mode<synchronous>, transform_indices = @transform_10, window_bounds = array<i64: 32, 32>}, {pipeline_mode = #tpu.pipeline_mode<synchronous>, transform_indices = @transform_11, window_bounds = array<i64: 1, 32>}, {pipeline_mode = #tpu.pipeline_mode<synchronous>, transform_indices = @transform_12, window_bounds = array<i64: 32, 128>}, {pipeline_mode = #tpu.pipeline_mode<synchronous>, transform_indices = @transform_13, window_bounds = array<i64: 1, 128>}, {transform_indices = @transform_14, window_bounds = array<i64: 16, 128>}]} {
    %c0 = arith.constant 0 : index
    %c0_0 = arith.constant 0 : index
    %0 = vector.load %arg1[%c0, %c0_0] : memref<16x256xbf16, #tpu.memory_space<vmem>>, vector<16x256xbf16>
    %c0_1 = arith.constant 0 : index
    %c0_2 = arith.constant 0 : index
    %1 = vector.load %arg3[%c0_1, %c0_2] : memref<256x256xbf16, #tpu.memory_space<vmem>>, vector<256x256xbf16>
    %c0_3 = arith.constant 0 : index
    %c0_4 = arith.constant 0 : index
    %2 = vector.load %arg4[%c0_3, %c0_4] : memref<1x256xf32, #tpu.memory_space<vmem>>, vector<1x256xf32>
    %cst = arith.constant dense<0.000000e+00> : vector<16x256xf32>
    %3 = tpu.matmul %0, %1, %cst {dimension_numbers = #tpu.dot_dimension_numbers<[1], [0], [0], [1], [0, 0, 1, 1], [], []>} : vector<16x256xbf16>, vector<256x256xbf16>, vector<16x256xf32> -> vector<16x256xf32>
    %4 = vector.broadcast %2 : vector<1x256xf32> to vector<16x256xf32>
    %5 = arith.addf %3, %4 : vector<16x256xf32>
    %cst_5 = arith.constant 0.000000e+00 : f32
    %6 = vector.broadcast %cst_5 : f32 to vector<16x256xf32>
    %7 = arith.maximumf %5, %6 : vector<16x256xf32>
    %c0_6 = arith.constant 0 : index
    %c0_7 = arith.constant 0 : index
    %c0_8 = arith.constant 0 : index
    %8 = vector.load %arg5[%c0_6, %c0_7, %c0_8] : memref<2x256x256xbf16, #tpu.memory_space<vmem>>, vector<1x256x256xbf16>
    %9 = vector.shape_cast %8 : vector<1x256x256xbf16> to vector<256x256xbf16>
    %c0_9 = arith.constant 0 : index
    %c0_10 = arith.constant 0 : index
    %c0_11 = arith.constant 0 : index
    %10 = vector.load %arg6[%c0_9, %c0_10, %c0_11] : memref<2x1x256xf32, #tpu.memory_space<vmem>>, vector<1x1x256xf32>
    %11 = vector.shape_cast %10 : vector<1x1x256xf32> to vector<1x256xf32>
    %12 = arith.truncf %7 : vector<16x256xf32> to vector<16x256xbf16>
    %cst_12 = arith.constant dense<0.000000e+00> : vector<16x256xf32>
    %13 = tpu.matmul %12, %9, %cst_12 {dimension_numbers = #tpu.dot_dimension_numbers<[1], [0], [0], [1], [0, 0, 1, 1], [], []>} : vector<16x256xbf16>, vector<256x256xbf16>, vector<16x256xf32> -> vector<16x256xf32>
    %14 = vector.broadcast %11 : vector<1x256xf32> to vector<16x256xf32>
    %15 = arith.addf %13, %14 : vector<16x256xf32>
    %cst_13 = arith.constant 0.000000e+00 : f32
    %16 = vector.broadcast %cst_13 : f32 to vector<16x256xf32>
    %17 = arith.maximumf %15, %16 : vector<16x256xf32>
    %c0_14 = arith.constant 0 : index
    %c0_15 = arith.constant 0 : index
    %c0_16 = arith.constant 0 : index
    %18 = vector.load %arg7[%c0_14, %c0_15, %c0_16] : memref<2x256x256xbf16, #tpu.memory_space<vmem>>, vector<1x256x256xbf16>
    %19 = vector.shape_cast %18 : vector<1x256x256xbf16> to vector<256x256xbf16>
    %c0_17 = arith.constant 0 : index
    %c0_18 = arith.constant 0 : index
    %c0_19 = arith.constant 0 : index
    %20 = vector.load %arg8[%c0_17, %c0_18, %c0_19] : memref<2x1x256xf32, #tpu.memory_space<vmem>>, vector<1x1x256xf32>
    %21 = vector.shape_cast %20 : vector<1x1x256xf32> to vector<1x256xf32>
    %22 = arith.truncf %17 : vector<16x256xf32> to vector<16x256xbf16>
    %cst_20 = arith.constant dense<0.000000e+00> : vector<16x256xf32>
    %23 = tpu.matmul %22, %19, %cst_20 {dimension_numbers = #tpu.dot_dimension_numbers<[1], [0], [0], [1], [0, 0, 1, 1], [], []>} : vector<16x256xbf16>, vector<256x256xbf16>, vector<16x256xf32> -> vector<16x256xf32>
    %24 = vector.broadcast %21 : vector<1x256xf32> to vector<16x256xf32>
    %25 = arith.addf %23, %24 : vector<16x256xf32>
    %cst_21 = arith.constant 0.000000e+00 : f32
    %26 = vector.broadcast %cst_21 : f32 to vector<16x256xf32>
    %27 = arith.maximumf %25, %26 : vector<16x256xf32>
    %28 = arith.addf %7, %27 : vector<16x256xf32>
    %c1 = arith.constant 1 : index
    %c0_22 = arith.constant 0 : index
    %c0_23 = arith.constant 0 : index
    %29 = vector.load %arg5[%c1, %c0_22, %c0_23] : memref<2x256x256xbf16, #tpu.memory_space<vmem>>, vector<1x256x256xbf16>
    %30 = vector.shape_cast %29 : vector<1x256x256xbf16> to vector<256x256xbf16>
    %c1_24 = arith.constant 1 : index
    %c0_25 = arith.constant 0 : index
    %c0_26 = arith.constant 0 : index
    %31 = vector.load %arg6[%c1_24, %c0_25, %c0_26] : memref<2x1x256xf32, #tpu.memory_space<vmem>>, vector<1x1x256xf32>
    %32 = vector.shape_cast %31 : vector<1x1x256xf32> to vector<1x256xf32>
    %33 = arith.truncf %28 : vector<16x256xf32> to vector<16x256xbf16>
    %cst_27 = arith.constant dense<0.000000e+00> : vector<16x256xf32>
    %34 = tpu.matmul %33, %30, %cst_27 {dimension_numbers = #tpu.dot_dimension_numbers<[1], [0], [0], [1], [0, 0, 1, 1], [], []>} : vector<16x256xbf16>, vector<256x256xbf16>, vector<16x256xf32> -> vector<16x256xf32>
    %35 = vector.broadcast %32 : vector<1x256xf32> to vector<16x256xf32>
    %36 = arith.addf %34, %35 : vector<16x256xf32>
    %cst_28 = arith.constant 0.000000e+00 : f32
    %37 = vector.broadcast %cst_28 : f32 to vector<16x256xf32>
    %38 = arith.maximumf %36, %37 : vector<16x256xf32>
    %c1_29 = arith.constant 1 : index
    %c0_30 = arith.constant 0 : index
    %c0_31 = arith.constant 0 : index
    %39 = vector.load %arg7[%c1_29, %c0_30, %c0_31] : memref<2x256x256xbf16, #tpu.memory_space<vmem>>, vector<1x256x256xbf16>
    %40 = vector.shape_cast %39 : vector<1x256x256xbf16> to vector<256x256xbf16>
    %c1_32 = arith.constant 1 : index
    %c0_33 = arith.constant 0 : index
    %c0_34 = arith.constant 0 : index
    %41 = vector.load %arg8[%c1_32, %c0_33, %c0_34] : memref<2x1x256xf32, #tpu.memory_space<vmem>>, vector<1x1x256xf32>
    %42 = vector.shape_cast %41 : vector<1x1x256xf32> to vector<1x256xf32>
    %43 = arith.truncf %38 : vector<16x256xf32> to vector<16x256xbf16>
    %cst_35 = arith.constant dense<0.000000e+00> : vector<16x256xf32>
    %44 = tpu.matmul %43, %40, %cst_35 {dimension_numbers = #tpu.dot_dimension_numbers<[1], [0], [0], [1], [0, 0, 1, 1], [], []>} : vector<16x256xbf16>, vector<256x256xbf16>, vector<16x256xf32> -> vector<16x256xf32>
    %45 = vector.broadcast %42 : vector<1x256xf32> to vector<16x256xf32>
    %46 = arith.addf %44, %45 : vector<16x256xf32>
    %cst_36 = arith.constant 0.000000e+00 : f32
    %47 = vector.broadcast %cst_36 : f32 to vector<16x256xf32>
    %48 = arith.maximumf %46, %47 : vector<16x256xf32>
    %49 = arith.addf %28, %48 : vector<16x256xf32>
    %50 = arith.truncf %49 : vector<16x256xf32> to vector<16x256xbf16>
    %c0_37 = arith.constant 0 : index
    %c0_38 = arith.constant 0 : index
    %51 = vector.load %arg9[%c0_37, %c0_38] : memref<256x32xbf16, #tpu.memory_space<vmem>>, vector<256x32xbf16>
    %cst_39 = arith.constant dense<0.000000e+00> : vector<16x32xf32>
    %52 = tpu.matmul %50, %51, %cst_39 {dimension_numbers = #tpu.dot_dimension_numbers<[1], [0], [0], [1], [0, 0, 1, 1], [], []>} : vector<16x256xbf16>, vector<256x32xbf16>, vector<16x32xf32> -> vector<16x32xf32>
    %53 = vector.extract_strided_slice %49 {offsets = [0, 0], sizes = [16, 128], strides = [1, 1]} : vector<16x256xf32> to vector<16x128xf32>
    %54 = vector.extract_strided_slice %49 {offsets = [0, 128], sizes = [16, 128], strides = [1, 1]} : vector<16x256xf32> to vector<16x128xf32>
    %55 = arith.maximumf %53, %54 : vector<16x128xf32>
    %56 = vector.extract_strided_slice %55 {offsets = [0, 0], sizes = [16, 64], strides = [1, 1]} : vector<16x128xf32> to vector<16x64xf32>
    %57 = vector.extract_strided_slice %55 {offsets = [0, 64], sizes = [16, 64], strides = [1, 1]} : vector<16x128xf32> to vector<16x64xf32>
    %58 = arith.maximumf %56, %57 : vector<16x64xf32>
    %59 = vector.extract_strided_slice %58 {offsets = [0, 0], sizes = [16, 32], strides = [1, 1]} : vector<16x64xf32> to vector<16x32xf32>
    %60 = vector.extract_strided_slice %58 {offsets = [0, 32], sizes = [16, 32], strides = [1, 1]} : vector<16x64xf32> to vector<16x32xf32>
    %61 = arith.maximumf %59, %60 : vector<16x32xf32>
    %62 = arith.truncf %61 : vector<16x32xf32> to vector<16x32xbf16>
    %c0_40 = arith.constant 0 : index
    %c0_41 = arith.constant 0 : index
    %63 = vector.load %arg10[%c0_40, %c0_41] : memref<32x32xbf16, #tpu.memory_space<vmem>>, vector<32x32xbf16>
    %cst_42 = arith.constant dense<0.000000e+00> : vector<16x32xf32>
    %64 = tpu.matmul %62, %63, %cst_42 {dimension_numbers = #tpu.dot_dimension_numbers<[1], [0], [0], [1], [0, 0, 1, 1], [], []>} : vector<16x32xbf16>, vector<32x32xbf16>, vector<16x32xf32> -> vector<16x32xf32>
    %65 = arith.addf %52, %64 : vector<16x32xf32>
    %c0_43 = arith.constant 0 : index
    %c0_44 = arith.constant 0 : index
    %66 = vector.load %arg2[%c0_43, %c0_44] : memref<16x32xbf16, #tpu.memory_space<vmem>>, vector<16x32xbf16>
    %c0_45 = arith.constant 0 : index
    %c0_46 = arith.constant 0 : index
    %67 = vector.load %arg11[%c0_45, %c0_46] : memref<32x32xbf16, #tpu.memory_space<vmem>>, vector<32x32xbf16>
    %cst_47 = arith.constant dense<0.000000e+00> : vector<16x32xf32>
    %68 = tpu.matmul %66, %67, %cst_47 {dimension_numbers = #tpu.dot_dimension_numbers<[1], [0], [0], [1], [0, 0, 1, 1], [], []>} : vector<16x32xbf16>, vector<32x32xbf16>, vector<16x32xf32> -> vector<16x32xf32>
    %69 = arith.addf %65, %68 : vector<16x32xf32>
    %c0_48 = arith.constant 0 : index
    %c0_49 = arith.constant 0 : index
    %70 = vector.load %arg12[%c0_48, %c0_49] : memref<1x32xf32, #tpu.memory_space<vmem>>, vector<1x32xf32>
    %71 = vector.broadcast %70 : vector<1x32xf32> to vector<16x32xf32>
    %72 = arith.addf %69, %71 : vector<16x32xf32>
    %cst_50 = arith.constant 0.000000e+00 : f32
    %73 = vector.broadcast %cst_50 : f32 to vector<16x32xf32>
    %74 = arith.maximumf %72, %73 : vector<16x32xf32>
    %75 = arith.truncf %74 : vector<16x32xf32> to vector<16x32xbf16>
    %c0_51 = arith.constant 0 : index
    %c0_52 = arith.constant 0 : index
    %76 = vector.load %arg13[%c0_51, %c0_52] : memref<32x128xbf16, #tpu.memory_space<vmem>>, vector<32x128xbf16>
    %cst_53 = arith.constant dense<0.000000e+00> : vector<16x128xf32>
    %77 = tpu.matmul %75, %76, %cst_53 {dimension_numbers = #tpu.dot_dimension_numbers<[1], [0], [0], [1], [0, 0, 1, 1], [], []>} : vector<16x32xbf16>, vector<32x128xbf16>, vector<16x128xf32> -> vector<16x128xf32>
    %c0_54 = arith.constant 0 : index
    %c0_55 = arith.constant 0 : index
    %78 = vector.load %arg14[%c0_54, %c0_55] : memref<1x128xf32, #tpu.memory_space<vmem>>, vector<1x128xf32>
    %79 = vector.broadcast %78 : vector<1x128xf32> to vector<16x128xf32>
    %80 = arith.addf %77, %79 : vector<16x128xf32>
    %c0_56 = arith.constant 0 : index
    %c0_57 = arith.constant 0 : index
    %81 = vector.load %arg15[%c0_56, %c0_57] : memref<16x128xf32, #tpu.memory_space<vmem>>, vector<16x128xf32>
    tpu.vector_store %arg15[%c0_56, %c0_57], %80 {strides = array<i32>} : memref<16x128xf32, #tpu.memory_space<vmem>>, vector<16x128xf32>,
    return
  }
  func.func @transform_0(%arg0: i32) -> (i32, i32) {
    %c0_i32 = arith.constant 0 : i32
    %c0_i32_0 = arith.constant 0 : i32
    return %arg0, %c0_i32 : i32, i32
  }
  func.func @transform_1(%arg0: i32) -> (i32, i32) {
    %c0_i32 = arith.constant 0 : i32
    %c0_i32_0 = arith.constant 0 : i32
    return %arg0, %c0_i32 : i32, i32
  }
  func.func @transform_2(%arg0: i32) -> (i32, i32) {
    %c0_i32 = arith.constant 0 : i32
    %c0_i32_0 = arith.constant 0 : i32
    %c0_i32_1 = arith.constant 0 : i32
    return %c0_i32, %c0_i32_0 : i32, i32
  }
  func.func @transform_3(%arg0: i32) -> (i32, i32) {
    %c0_i32 = arith.constant 0 : i32
    %c0_i32_0 = arith.constant 0 : i32
    %c0_i32_1 = arith.constant 0 : i32
    return %c0_i32, %c0_i32_0 : i32, i32
  }
  func.func @transform_4(%arg0: i32) -> (i32, i32, i32) {
    %c0_i32 = arith.constant 0 : i32
    %c0_i32_0 = arith.constant 0 : i32
    %c0_i32_1 = arith.constant 0 : i32
    %c0_i32_2 = arith.constant 0 : i32
    return %c0_i32, %c0_i32_0, %c0_i32_1 : i32, i32, i32
  }
  func.func @transform_5(%arg0: i32) -> (i32, i32, i32) {
    %c0_i32 = arith.constant 0 : i32
    %c0_i32_0 = arith.constant 0 : i32
    %c0_i32_1 = arith.constant 0 : i32
    %c0_i32_2 = arith.constant 0 : i32
    return %c0_i32, %c0_i32_0, %c0_i32_1 : i32, i32, i32
  }
  func.func @transform_6(%arg0: i32) -> (i32, i32, i32) {
    %c0_i32 = arith.constant 0 : i32
    %c0_i32_0 = arith.constant 0 : i32
    %c0_i32_1 = arith.constant 0 : i32
    %c0_i32_2 = arith.constant 0 : i32
    return %c0_i32, %c0_i32_0, %c0_i32_1 : i32, i32, i32
  }
  func.func @transform_7(%arg0: i32) -> (i32, i32, i32) {
    %c0_i32 = arith.constant 0 : i32
    %c0_i32_0 = arith.constant 0 : i32
    %c0_i32_1 = arith.constant 0 : i32
    %c0_i32_2 = arith.constant 0 : i32
    return %c0_i32, %c0_i32_0, %c0_i32_1 : i32, i32, i32
  }
  func.func @transform_8(%arg0: i32) -> (i32, i32) {
    %c0_i32 = arith.constant 0 : i32
    %c0_i32_0 = arith.constant 0 : i32
    %c0_i32_1 = arith.constant 0 : i32
    return %c0_i32, %c0_i32_0 : i32, i32
  }
  func.func @transform_9(%arg0: i32) -> (i32, i32) {
    %c0_i32 = arith.constant 0 : i32
    %c0_i32_0 = arith.constant 0 : i32
    %c0_i32_1 = arith.constant 0 : i32
    return %c0_i32, %c0_i32_0 : i32, i32
  }
  func.func @transform_10(%arg0: i32) -> (i32, i32) {
    %c0_i32 = arith.constant 0 : i32
    %c0_i32_0 = arith.constant 0 : i32
    %c0_i32_1 = arith.constant 0 : i32
    return %c0_i32, %c0_i32_0 : i32, i32
  }
  func.func @transform_11(%arg0: i32) -> (i32, i32) {
    %c0_i32 = arith.constant 0 : i32
    %c0_i32_0 = arith.constant 0 : i32
    %c0_i32_1 = arith.constant 0 : i32
    return %c0_i32, %c0_i32_0 : i32, i32
  }
  func.func @transform_12(%arg0: i32) -> (i32, i32) {
    %c0_i32 = arith.constant 0 : i32
    %c0_i32_0 = arith.constant 0 : i32
    %c0_i32_1 = arith.constant 0 : i32
    return %c0_i32, %c0_i32_0 : i32, i32
  }
  func.func @transform_13(%arg0: i32) -> (i32, i32) {
    %c0_i32 = arith.constant 0 : i32
    %c0_i32_0 = arith.constant 0 : i32
    %c0_i32_1 = arith.constant 0 : i32
    return %c0_i32, %c0_i32_0 : i32, i32
  }
  func.func @transform_14(%arg0: i32) -> (i32, i32) {
    %c0_i32 = arith.constant 0 : i32
    %c0_i32_0 = arith.constant 0 : i32
    return %arg0, %c0_i32 : i32, i32
  }
}

</mosaic_0001>

<llo_original>
// kernel: pose_refine_forward.1
$region0: #{pose_refine_forward.1}
  #allocation0 [shape = 'u32[]', space=smem, size = 0x4, offset = 0x4, fixed_abs, tag = 'smem constant byte address 0x4 - core index']
  #allocation1 [shape = 'u32[72,128]{1,0:T(1,128)}', space=vmem, size = 0x9000, scoped, tag = 'internal scratch']
  %s0 = inlined_call_operand.vmem [shape: bf16[32,256], index: 0, kind: input, shape index: {}]
  %s1 = inlined_call_operand.vmem [shape: bf16[32,32], index: 1, kind: input, shape index: {}]
  %s2 = inlined_call_operand.vmem [shape: bf16[256,256], index: 2, kind: input, shape index: {}]
  %s3 = inlined_call_operand.vmem [shape: f32[1,256], index: 3, kind: input, shape index: {}]
  %s4 = inlined_call_operand.vmem [shape: bf16[2,256,256], index: 4, kind: input, shape index: {}]
  %s5 = inlined_call_operand.vmem [shape: f32[2,1,256], index: 5, kind: input, shape index: {}]
  %s6 = inlined_call_operand.vmem [shape: bf16[2,256,256], index: 6, kind: input, shape index: {}]
  %s7 = inlined_call_operand.vmem [shape: f32[2,1,256], index: 7, kind: input, shape index: {}]
  %s8 = inlined_call_operand.vmem [shape: bf16[256,32], index: 8, kind: input, shape index: {}]
  %s9 = inlined_call_operand.vmem [shape: bf16[32,32], index: 9, kind: input, shape index: {}]
  %s10 = inlined_call_operand.vmem [shape: bf16[32,32], index: 10, kind: input, shape index: {}]
  %s11 = inlined_call_operand.vmem [shape: f32[1,32], index: 11, kind: input, shape index: {}]
  %s12 = inlined_call_operand.vmem [shape: bf16[32,128], index: 12, kind: input, shape index: {}]
  %s13 = inlined_call_operand.vmem [shape: f32[1,128], index: 13, kind: input, shape index: {}]
  %s14 = inlined_call_operand.vmem [shape: f32[32,128], index: 14, kind: output, shape index: {}]
  %s15 = sld [smem:[#allocation0]]
  $region89: #{pose_refine_forward.1} parent=0
    _
  %s17 = ssub.s32 1, %s15
  %s18 = scalar_select 0, %s17, %s15
  loop: start=0, step=1, limit=4
  $region2: #{pose_refine_forward.1} parent=0 // loop_pre_header
    _
  $region3: #{pose_refine_forward.1} parent=0 // loop_header
    %s20 = sphi 0, %s24
    %p21 = scmp.ge.s32.totalorder %s20, 4
    %s30 = sphi 0, %s32
    %s33 = sphi 0, %s30
    %s34 = sphi 0, %s33
    %s50 = sphi 0, %s34
    %s56 = sphi 0, %s58
    %s59 = sphi 0, %s56
    %s60 = sphi 0, %s59
    %s76 = sphi 0, %s60
    %s80 = sphi 0, %s80
    %s82 = sphi 0, %s80
    %s83 = sphi 0, %s82
    %s97 = sphi 0, %s83
    %s101 = sphi 0, %s101
    %s103 = sphi 0, %s101
    %s104 = sphi 0, %s103
    %s118 = sphi 0, %s104
    %s122 = sphi 0, %s122
    %s124 = sphi 0, %s122
    %s125 = sphi 0, %s124
    %s139 = sphi 0, %s125
    %s143 = sphi 0, %s143
    %s145 = sphi 0, %s143
    %s146 = sphi 0, %s145
    %s160 = sphi 0, %s146
    %s164 = sphi 0, %s164
    %s166 = sphi 0, %s164
    %s167 = sphi 0, %s166
    %s181 = sphi 0, %s167
    %s185 = sphi 0, %s185
    %s187 = sphi 0, %s185
    %s188 = sphi 0, %s187
    %s202 = sphi 0, %s188
    %s206 = sphi 0, %s206
    %s208 = sphi 0, %s206
    %s209 = sphi 0, %s208
    %s223 = sphi 0, %s209
    %s227 = sphi 0, %s227
    %s229 = sphi 0, %s227
    %s230 = sphi 0, %s229
    %s244 = sphi 0, %s230
    %s248 = sphi 0, %s248
    %s250 = sphi 0, %s248
    %s251 = sphi 0, %s250
    %s265 = sphi 0, %s251
    %s269 = sphi 0, %s269
    %s271 = sphi 0, %s269
    %s272 = sphi 0, %s271
    %s286 = sphi 0, %s272
    %s290 = sphi 0, %s290
    %s292 = sphi 0, %s290
    %s293 = sphi 0, %s292
    %s307 = sphi 0, %s293
    %s311 = sphi 0, %s311
    %s313 = sphi 0, %s311
    %s314 = sphi 0, %s313
    %s328 = sphi 0, %s314
    %s334 = sphi 0, %s336
    %s337 = sphi 0, %s334
    %s338 = sphi 0, %s337
    %s354 = sphi 0, %s338
  $region4: #{pose_refine_forward.1} parent=0 // loop_header_branch
    %23 = sbr.rel (%p21) target = $region8
  $region5: #{pose_refine_forward.1} parent=0 // loop_body
    %s25 = ssub.s32 %s20, 1
    %s26 = ssub.s32 %s20, 2
    %s27 = sadd.s32 %s20, 1
    %s28 = ssub.s32 %s20, %s27
    %p29 = scmp.eq.s32.totalorder %s28, 0
    %s31 = sadd.s32 %s30, 1
    %s32 = scalar_select %p29, %s30, %s31
    %p35 = pneg %p29
    %p36 = scmp.eq.s32.totalorder %s20, 1
    %p37 = por %p35, %p36
    %p38 = scmp.ne.s32.totalorder %s30, %s33
    %p39 = scmp.eq.s32.totalorder %s20, 0
    %p40 = por %p38, %p39
    %p41 = scmp.ne.s32.totalorder %s30, %s33
    %p42 = scmp.eq.s32.totalorder %s25, 1
    %p43 = por %p41, %p42
    %p44 = scmp.ne.s32.totalorder %s33, %s34
    %p45 = scmp.eq.s32.totalorder %s25, 0
    %p46 = por %p44, %p45
    %p47 = scmp.ne.s32.totalorder %s33, %s34
    %p48 = scmp.eq.s32.totalorder %s26, 1
    %p49 = por %p47, %p48
    %p51 = scmp.ne.s32.totalorder %s34, %s50
    %p52 = scmp.eq.s32.totalorder %s26, 0
    %p53 = por %p51, %p52
    %s54 = ssub.s32 %s20, %s27
    %p55 = scmp.eq.s32.totalorder %s54, 0
    %s57 = sadd.s32 %s56, 1
    %s58 = scalar_select %p55, %s56, %s57
    %p61 = pneg %p55
    %p62 = scmp.eq.s32.totalorder %s20, 1
    %p63 = por %p61, %p62
    %p64 = scmp.ne.s32.totalorder %s56, %s59
    %p65 = scmp.eq.s32.totalorder %s20, 0
    %p66 = por %p64, %p65
    %p67 = scmp.ne.s32.totalorder %s56, %s59
    %p68 = scmp.eq.s32.totalorder %s25, 1
    %p69 = por %p67, %p68
    %p70 = scmp.ne.s32.totalorder %s59, %s60
    %p71 = scmp.eq.s32.totalorder %s25, 0
    %p72 = por %p70, %p71
    %p73 = scmp.ne.s32.totalorder %s59, %s60
    %p74 = scmp.eq.s32.totalorder %s26, 1
    %p75 = por %p73, %p74
    %p77 = scmp.ne.s32.totalorder %s60, %s76
    %p78 = scmp.eq.s32.totalorder %s26, 0
    %p79 = por %p77, %p78
    %s81 = sadd.s32 %s80, 1
    %p84 = scmp.eq.s32.totalorder %s20, 1
    %p85 = scmp.ne.s32.totalorder %s80, %s82
    %p86 = scmp.eq.s32.totalorder %s20, 0
    %p87 = por %p85, %p86
    %p88 = scmp.ne.s32.totalorder %s80, %s82
    %p89 = scmp.eq.s32.totalorder %s25, 1
    %p90 = por %p88, %p89
    %p91 = scmp.ne.s32.totalorder %s82, %s83
    %p92 = scmp.eq.s32.totalorder %s25, 0
    %p93 = por %p91, %p92
    %p94 = scmp.ne.s32.totalorder %s82, %s83
    %p95 = scmp.eq.s32.totalorder %s26, 1
    %p96 = por %p94, %p95
    %p98 = scmp.ne.s32.totalorder %s83, %s97
    %p99 = scmp.eq.s32.totalorder %s26, 0
    %p100 = por %p98, %p99
    %s102 = sadd.s32 %s101, 1
    %p105 = scmp.eq.s32.totalorder %s20, 1
    %p106 = scmp.ne.s32.totalorder %s101, %s103
    %p107 = scmp.eq.s32.totalorder %s20, 0
    %p108 = por %p106, %p107
    %p109 = scmp.ne.s32.totalorder %s101, %s103
    %p110 = scmp.eq.s32.totalorder %s25, 1
    %p111 = por %p109, %p110
    %p112 = scmp.ne.s32.totalorder %s103, %s104
    %p113 = scmp.eq.s32.totalorder %s25, 0
    %p114 = por %p112, %p113
    %p115 = scmp.ne.s32.totalorder %s103, %s104
    %p116 = scmp.eq.s32.totalorder %s26, 1
    %p117 = por %p115, %p116
    %p119 = scmp.ne.s32.totalorder %s104, %s118
    %p120 = scmp.eq.s32.totalorder %s26, 0
    %p121 = por %p119, %p120
    %s123 = sadd.s32 %s122, 1
    %p126 = scmp.eq.s32.totalorder %s20, 1
    %p127 = scmp.ne.s32.totalorder %s122, %s124
    %p128 = scmp.eq.s32.totalorder %s20, 0
    %p129 = por %p127, %p128
    %p130 = scmp.ne.s32.totalorder %s122, %s124
    %p131 = scmp.eq.s32.totalorder %s25, 1
    %p132 = por %p130, %p131
    %p133 = scmp.ne.s32.totalorder %s124, %s125
    %p134 = scmp.eq.s32.totalorder %s25, 0
    %p135 = por %p133, %p134
    %p136 = scmp.ne.s32.totalorder %s124, %s125
    %p137 = scmp.eq.s32.totalorder %s26, 1
    %p138 = por %p136, %p137
    %p140 = scmp.ne.s32.totalorder %s125, %s139
    %p141 = scmp.eq.s32.totalorder %s26, 0
    %p142 = por %p140, %p141
    %s144 = sadd.s32 %s143, 1
    %p147 = scmp.eq.s32.totalorder %s20, 1
    %p148 = scmp.ne.s32.totalorder %s143, %s145
    %p149 = scmp.eq.s32.totalorder %s20, 0
    %p150 = por %p148, %p149
    %p151 = scmp.ne.s32.totalorder %s143, %s145
    %p152 = scmp.eq.s32.totalorder %s25, 1
    %p153 = por %p151, %p152
    %p154 = scmp.ne.s32.totalorder %s145, %s146
    %p155 = scmp.eq.s32.totalorder %s25, 0
    %p156 = por %p154, %p155
    %p157 = scmp.ne.s32.totalorder %s145, %s146
    %p158 = scmp.eq.s32.totalorder %s26, 1
    %p159 = por %p157, %p158
    %p161 = scmp.ne.s32.totalorder %s146, %s160
    %p162 = scmp.eq.s32.totalorder %s26, 0
    %p163 = por %p161, %p162
    %s165 = sadd.s32 %s164, 1
    %p168 = scmp.eq.s32.totalorder %s20, 1
    %p169 = scmp.ne.s32.totalorder %s164, %s166
    %p170 = scmp.eq.s32.totalorder %s20, 0
    %p171 = por %p169, %p170
    %p172 = scmp.ne.s32.totalorder %s164, %s166
    %p173 = scmp.eq.s32.totalorder %s25, 1
    %p174 = por %p172, %p173
    %p175 = scmp.ne.s32.totalorder %s166, %s167
    %p176 = scmp.eq.s32.totalorder %s25, 0
    %p177 = por %p175, %p176
    %p178 = scmp.ne.s32.totalorder %s166, %s167
    %p179 = scmp.eq.s32.totalorder %s26, 1
    %p180 = por %p178, %p179
    %p182 = scmp.ne.s32.totalorder %s167, %s181
    %p183 = scmp.eq.s32.totalorder %s26, 0
    %p184 = por %p182, %p183
    %s186 = sadd.s32 %s185, 1
    %p189 = scmp.eq.s32.totalorder %s20, 1
    %p190 = scmp.ne.s32.totalorder %s185, %s187
    %p191 = scmp.eq.s32.totalorder %s20, 0
    %p192 = por %p190, %p191
    %p193 = scmp.ne.s32.totalorder %s185, %s187
    %p194 = scmp.eq.s32.totalorder %s25, 1
    %p195 = por %p193, %p194
    %p196 = scmp.ne.s32.totalorder %s187, %s188
    %p197 = scmp.eq.s32.totalorder %s25, 0
    %p198 = por %p196, %p197
    %p199 = scmp.ne.s32.totalorder %s187, %s188
    %p200 = scmp.eq.s32.totalorder %s26, 1
    %p201 = por %p199, %p200
    %p203 = scmp.ne.s32.totalorder %s188, %s202
    %p204 = scmp.eq.s32.totalorder %s26, 0
    %p205 = por %p203, %p204
    %s207 = sadd.s32 %s206, 1
    %p210 = scmp.eq.s32.totalorder %s20, 1
    %p211 = scmp.ne.s32.totalorder %s206, %s208
    %p212 = scmp.eq.s32.totalorder %s20, 0
    %p213 = por %p211, %p212
    %p214 = scmp.ne.s32.totalorder %s206, %s208
    %p215 = scmp.eq.s32.totalorder %s25, 1
    %p216 = por %p214, %p215
    %p217 = scmp.ne.s32.totalorder %s208, %s209
    %p218 = scmp.eq.s32.totalorder %s25, 0
    %p219 = por %p217, %p218
    %p220 = scmp.ne.s32.totalorder %s208, %s209
    %p221 = scmp.eq.s32.totalorder %s26, 1
    %p222 = por %p220, %p221
    %p224 = scmp.ne.s32.totalorder %s209, %s223
    %p225 = scmp.eq.s32.totalorder %s26, 0
    %p226 = por %p224, %p225
    %s228 = sadd.s32 %s227, 1
    %p231 = scmp.eq.s32.totalorder %s20, 1
    %p232 = scmp.ne.s32.totalorder %s227, %s229
    %p233 = scmp.eq.s32.totalorder %s20, 0
    %p234 = por %p232, %p233
    %p235 = scmp.ne.s32.totalorder %s227, %s229
    %p236 = scmp.eq.s32.totalorder %s25, 1
    %p237 = por %p235, %p236
    %p238 = scmp.ne.s32.totalorder %s229, %s230
    %p239 = scmp.eq.s32.totalorder %s25, 0
    %p240 = por %p238, %p239
    %p241 = scmp.ne.s32.totalorder %s229, %s230
    %p242 = scmp.eq.s32.totalorder %s26, 1
    %p243 = por %p241, %p242
    %p245 = scmp.ne.s32.totalorder %s230, %s244
    %p246 = scmp.eq.s32.totalorder %s26, 0
    %p247 = por %p245, %p246
    %s249 = sadd.s32 %s248, 1
    %p252 = scmp.eq.s32.totalorder %s20, 1
    %p253 = scmp.ne.s32.totalorder %s248, %s250
    %p254 = scmp.eq.s32.totalorder %s20, 0
    %p255 = por %p253, %p254
    %p256 = scmp.ne.s32.totalorder %s248, %s250
    %p257 = scmp.eq.s32.totalorder %s25, 1
    %p258 = por %p256, %p257
    %p259 = scmp.ne.s32.totalorder %s250, %s251
    %p260 = scmp.eq.s32.totalorder %s25, 0
    %p261 = por %p259, %p260
    %p262 = scmp.ne.s32.totalorder %s250, %s251
    %p263 = scmp.eq.s32.totalorder %s26, 1
    %p264 = por %p262, %p263
    %p266 = scmp.ne.s32.totalorder %s251, %s265
    %p267 = scmp.eq.s32.totalorder %s26, 0
    %p268 = por %p266, %p267
    %s270 = sadd.s32 %s269, 1
    %p273 = scmp.eq.s32.totalorder %s20, 1
    %p274 = scmp.ne.s32.totalorder %s269, %s271
    %p275 = scmp.eq.s32.totalorder %s20, 0
    %p276 = por %p274, %p275
    %p277 = scmp.ne.s32.totalorder %s269, %s271
    %p278 = scmp.eq.s32.totalorder %s25, 1
    %p279 = por %p277, %p278
    %p280 = scmp.ne.s32.totalorder %s271, %s272
    %p281 = scmp.eq.s32.totalorder %s25, 0
    %p282 = por %p280, %p281
    %p283 = scmp.ne.s32.totalorder %s271, %s272
    %p284 = scmp.eq.s32.totalorder %s26, 1
    %p285 = por %p283, %p284
    %p287 = scmp.ne.s32.totalorder %s272, %s286
    %p288 = scmp.eq.s32.totalorder %s26, 0
    %p289 = por %p287, %p288
    %s291 = sadd.s32 %s290, 1
    %p294 = scmp.eq.s32.totalorder %s20, 1
    %p295 = scmp.ne.s32.totalorder %s290, %s292
    %p296 = scmp.eq.s32.totalorder %s20, 0
    %p297 = por %p295, %p296
    %p298 = scmp.ne.s32.totalorder %s290, %s292
    %p299 = scmp.eq.s32.totalorder %s25, 1
    %p300 = por %p298, %p299
    %p301 = scmp.ne.s32.totalorder %s292, %s293
    %p302 = scmp.eq.s32.totalorder %s25, 0
    %p303 = por %p301, %p302
    %p304 = scmp.ne.s32.totalorder %s292, %s293
    %p305 = scmp.eq.s32.totalorder %s26, 1
    %p306 = por %p304, %p305
    %p308 = scmp.ne.s32.totalorder %s293, %s307
    %p309 = scmp.eq.s32.totalorder %s26, 0
    %p310 = por %p308, %p309
    %s312 = sadd.s32 %s311, 1
    %p315 = scmp.eq.s32.totalorder %s20, 1
    %p316 = scmp.ne.s32.totalorder %s311, %s313
    %p317 = scmp.eq.s32.totalorder %s20, 0
    %p318 = por %p316, %p317
    %p319 = scmp.ne.s32.totalorder %s311, %s313
    %p320 = scmp.eq.s32.totalorder %s25, 1
    %p321 = por %p319, %p320
    %p322 = scmp.ne.s32.totalorder %s313, %s314
    %p323 = scmp.eq.s32.totalorder %s25, 0
    %p324 = por %p322, %p323
    %p325 = scmp.ne.s32.totalorder %s313, %s314
    %p326 = scmp.eq.s32.totalorder %s26, 1
    %p327 = por %p325, %p326
    %p329 = scmp.ne.s32.totalorder %s314, %s328
    %p330 = scmp.eq.s32.totalorder %s26, 0
    %p331 = por %p329, %p330
    %s332 = ssub.s32 %s20, %s27
    %p333 = scmp.eq.s32.totalorder %s332, 0
    %s335 = sadd.s32 %s334, 1
    %s336 = scalar_select %p333, %s334, %s335
    %p339 = pneg %p333
    %p340 = scmp.eq.s32.totalorder %s20, 1
    %p341 = por %p339, %p340
    %p342 = scmp.ne.s32.totalorder %s334, %s337
    %p343 = scmp.eq.s32.totalorder %s20, 0
    %p344 = por %p342, %p343
    %p345 = scmp.ne.s32.totalorder %s334, %s337
    %p346 = scmp.eq.s32.totalorder %s25, 1
    %p347 = por %p345, %p346
    %p348 = scmp.ne.s32.totalorder %s337, %s338
    %p349 = scmp.eq.s32.totalorder %s25, 0
    %p350 = por %p348, %p349
    %p351 = scmp.ne.s32.totalorder %s337, %s338
    %p352 = scmp.eq.s32.totalorder %s26, 1
    %p353 = por %p351, %p352
    %p355 = scmp.ne.s32.totalorder %s338, %s354
    %p356 = scmp.eq.s32.totalorder %s26, 0
    %p357 = por %p355, %p356
    %p358 = scmp.le.s32.totalorder 1, %s20
    %p359 = scmp.lt.s32.totalorder %s20, 3
    %p360 = pnand %p358, %p359
    %p361 = pneg %p360
    // Predicated region
    $region9: #{pose_refine_forward.1} parent=5 // pred_check
      _
    $region10: #{pose_refine_forward.1} parent=5 // pred_check_branch
      %363 = sbr.rel (%p360) target = $region12
    $region11: #{pose_refine_forward.1} parent=5 // pred_region
      %s364 = ssub.s32 %s20, 1
      // Predicated region
      $region13: #{pose_refine_forward.1} parent=11 // pred_check
        %p365 = pneg %p93
      $region14: #{pose_refine_forward.1} parent=11 // pred_check_branch
        %367 = sbr.rel (%p365) target = $region16
      $region15: #{pose_refine_forward.1} parent=11 // pred_region
        _
      $region16: #{pose_refine_forward.1} parent=11 // pred_fallthru
        _
      // Predicated region
      $region17: #{pose_refine_forward.1} parent=11 // pred_check
        %p368 = pneg %p114
      $region18: #{pose_refine_forward.1} parent=11 // pred_check_branch
        %370 = sbr.rel (%p368) target = $region20
      $region19: #{pose_refine_forward.1} parent=11 // pred_region
        _
      $region20: #{pose_refine_forward.1} parent=11 // pred_fallthru
        _
      // Predicated region
      $region21: #{pose_refine_forward.1} parent=11 // pred_check
        %p371 = pneg %p135
      $region22: #{pose_refine_forward.1} parent=11 // pred_check_branch
        %373 = sbr.rel (%p371) target = $region24
      $region23: #{pose_refine_forward.1} parent=11 // pred_region
        _
      $region24: #{pose_refine_forward.1} parent=11 // pred_fallthru
        _
      // Predicated region
      $region25: #{pose_refine_forward.1} parent=11 // pred_check
        %p374 = pneg %p156
      $region26: #{pose_refine_forward.1} parent=11 // pred_check_branch
        %376 = sbr.rel (%p374) target = $region28
      $region27: #{pose_refine_forward.1} parent=11 // pred_region
        _
      $region28: #{pose_refine_forward.1} parent=11 // pred_fallthru
        _
      // Predicated region
      $region29: #{pose_refine_forward.1} parent=11 // pred_check
        %p377 = pneg %p177
      $region30: #{pose_refine_forward.1} parent=11 // pred_check_branch
        %379 = sbr.rel (%p377) target = $region32
      $region31: #{pose_refine_forward.1} parent=11 // pred_region
        _
      $region32: #{pose_refine_forward.1} parent=11 // pred_fallthru
        _
      // Predicated region
      $region33: #{pose_refine_forward.1} parent=11 // pred_check
        %p380 = pneg %p198
      $region34: #{pose_refine_forward.1} parent=11 // pred_check_branch
        %382 = sbr.rel (%p380) target = $region36
      $region35: #{pose_refine_forward.1} parent=11 // pred_region
        _
      $region36: #{pose_refine_forward.1} parent=11 // pred_fallthru
        _
      // Predicated region
      $region37: #{pose_refine_forward.1} parent=11 // pred_check
        %p383 = pneg %p219
      $region38: #{pose_refine_forward.1} parent=11 // pred_check_branch
        %385 = sbr.rel (%p383) target = $region40
      $region39: #{pose_refine_forward.1} parent=11 // pred_region
        _
      $region40: #{pose_refine_forward.1} parent=11 // pred_fallthru
        _
      // Predicated region
      $region41: #{pose_refine_forward.1} parent=11 // pred_check
        %p386 = pneg %p240
      $region42: #{pose_refine_forward.1} parent=11 // pred_check_branch
        %388 = sbr.rel (%p386) target = $region44
      $region43: #{pose_refine_forward.1} parent=11 // pred_region
        _
      $region44: #{pose_refine_forward.1} parent=11 // pred_fallthru
        _
      // Predicated region
      $region45: #{pose_refine_forward.1} parent=11 // pred_check
        %p389 = pneg %p261
      $region46: #{pose_refine_forward.1} parent=11 // pred_check_branch
        %391 = sbr.rel (%p389) target = $region48
      $region47: #{pose_refine_forward.1} parent=11 // pred_region
        _
      $region48: #{pose_refine_forward.1} parent=11 // pred_fallthru
        _
      // Predicated region
      $region49: #{pose_refine_forward.1} parent=11 // pred_check
        %p392 = pneg %p282
      $region50: #{pose_refine_forward.1} parent=11 // pred_check_branch
        %394 = sbr.rel (%p392) target = $region52
      $region51: #{pose_refine_forward.1} parent=11 // pred_region
        _
      $region52: #{pose_refine_forward.1} parent=11 // pred_fallthru
        _
      // Predicated region
      $region53: #{pose_refine_forward.1} parent=11 // pred_check
        %p395 = pneg %p303
      $region54: #{pose_refine_forward.1} parent=11 // pred_check_branch
        %397 = sbr.rel (%p395) target = $region56
      $region55: #{pose_refine_forward.1} parent=11 // pred_region
        _
      $region56: #{pose_refine_forward.1} parent=11 // pred_fallthru
        _
      // Predicated region
      $region57: #{pose_refine_forward.1} parent=11 // pred_check
        %p398 = pneg %p324
      $region58: #{pose_refine_forward.1} parent=11 // pred_check_branch
        %400 = sbr.rel (%p398) target = $region60
      $region59: #{pose_refine_forward.1} parent=11 // pred_region
        _
      $region60: #{pose_refine_forward.1} parent=11 // pred_fallthru
        _
    $region12: #{pose_refine_forward.1} parent=5 // pred_fallthru
      _
    %p401 = scmp.lt.s32.totalorder %s20, 2
    // Predicated region
    $region61: #{pose_refine_forward.1} parent=5 // pred_check
      %p402 = pneg %p401
    $region62: #{pose_refine_forward.1} parent=5 // pred_check_branch
      %404 = sbr.rel (%p402) target = $region64
    $region63: #{pose_refine_forward.1} parent=5 // pred_region
      // Predicated region
      $region65: #{pose_refine_forward.1} parent=63 // pred_check
        %p405 = pneg %p40
      $region66: #{pose_refine_forward.1} parent=63 // pred_check_branch
        %407 = sbr.rel (%p405) target = $region68
      $region67: #{pose_refine_forward.1} parent=63 // pred_region
        %s408 = smul.u32 2, %s20
        %p409 = scmp.lt.s32.totalorder %s408, 3
        %s410 = scalar_select %p409, %s408, 3
        %s411 = smul.addr %s410, 2
        %s412 = smul.addr %s411, 4
        %s413 = scalar_lea.vmem %s0, %s412
        %s414 = smul.u32 2, %s20
      $region68: #{pose_refine_forward.1} parent=63 // pred_fallthru
        _
      // Predicated region
      $region69: #{pose_refine_forward.1} parent=63 // pred_check
        %p415 = pneg %p66
      $region70: #{pose_refine_forward.1} parent=63 // pred_check_branch
        %417 = sbr.rel (%p415) target = $region72
      $region71: #{pose_refine_forward.1} parent=63 // pred_region
        %s418 = smul.u32 2, %s20
        %p419 = scmp.lt.s32.totalorder %s418, 3
        %s420 = scalar_select %p419, %s418, 3
        %s421 = smul.addr %s420, 4
        %s422 = scalar_lea.vmem %s1, %s421
        %s423 = smul.u32 2, %s20
      $region72: #{pose_refine_forward.1} parent=63 // pred_fallthru
        _
    $region64: #{pose_refine_forward.1} parent=5 // pred_fallthru
      _
    %p424 = scmp.le.s32.totalorder 1, %s20
    %p425 = scmp.lt.s32.totalorder %s20, 3
    %p426 = pnand %p424, %p425
    %p427 = pneg %p426
    // Predicated region
    $region73: #{pose_refine_forward.1} parent=5 // pred_check
      _
    $region74: #{pose_refine_forward.1} parent=5 // pred_check_branch
      %429 = sbr.rel (%p426) target = $region76
    $region75: #{pose_refine_forward.1} parent=5 // pred_region
      %s430 = ssub.s32 %s20, 1
      %s431 = smul.u32 2, %s25
      %p432 = scmp.lt.s32.totalorder %s431, 3
      %s433 = scalar_select %p432, %s431, 3
      %s434 = smul.addr %s433, 2
      %s435 = smul.addr %s434, 4
      %s436 = scalar_lea.vmem %s0, %s435
      %p437 = pneg %p46
      %p438 = pneg %p43
      %s439 = smul.u32 2, %s25
      %p440 = scmp.lt.s32.totalorder %s439, 3
      %s441 = scalar_select %p440, %s439, 3
      %s442 = smul.addr %s441, 4
      %s443 = scalar_lea.vmem %s1, %s442
      %p444 = pneg %p72
      %p445 = pneg %p69
      %p446 = pneg %p93
      %p447 = pneg %p90
      %p448 = pneg %p114
      %p449 = pneg %p111
      %p450 = pneg %p135
      %p451 = pneg %p132
      %p452 = pneg %p156
      %p453 = pneg %p153
      %p454 = pneg %p177
      %p455 = pneg %p174
      %p456 = pneg %p198
      %p457 = pneg %p195
      %p458 = pneg %p219
      %p459 = pneg %p216
      %p460 = pneg %p240
      %p461 = pneg %p237
      %p462 = pneg %p261
      %p463 = pneg %p258
      %p464 = pneg %p282
      %p465 = pneg %p279
      %p466 = pneg %p303
      %p467 = pneg %p300
      %p468 = pneg %p324
      %p469 = pneg %p321
      %p470 = pneg %p350
      %p471 = pneg %p347
      %s472 = smul.u32 2, %s25
      %p473 = scmp.lt.s32.totalorder %s472, 3
      %s474 = scalar_select %p473, %s472, 3
      %s475 = smul.addr %s474, 8
      %s476 = scalar_lea.vmem %s14, %s475
      %s477 = smul.u32 2, %s25
      %p478 = scmp.lt.s32.totalorder %s477, 3
      %s479 = scalar_select %p478, %s477, 3
      %s480 = smul.addr %s479, 2
      %s481 = smul.addr %s480, 4
      %s482 = scalar_lea.vmem %s0, %s481
      %s483 = smul.u32 2, %s25
      %s484 = smul.u32 2, %s25
      %p485 = scmp.lt.s32.totalorder %s484, 3
      %s486 = scalar_select %p485, %s484, 3
      %s487 = smul.addr %s486, 4
      %s488 = scalar_lea.vmem %s1, %s487
      %s489 = smul.u32 2, %s25
      %s490 = smul.u32 2, %s25
      %p491 = scmp.lt.s32.totalorder %s490, 3
      %s492 = scalar_select %p491, %s490, 3
      %s493 = smul.addr %s492, 8
      %s494 = scalar_lea.vmem %s14, %s493
      %s495 = smul.u32 2, %s25
      %v497 = vld [vmem:[%s482] sm:$0xff]
      %v498 = vld [vmem:[%s482 + $0x8] sm:$0xff]
      %v499 = vld [vmem:[%s2] sm:$0xff]
      %v500 = vld [vmem:[%s2 + $0x8] sm:$0xff]
      %v501 = vld [vmem:[%s2 + $0x10] sm:$0xff]
      %v502 = vld [vmem:[%s2 + $0x18] sm:$0xff]
      %v503 = vld [vmem:[%s2 + $0x20] sm:$0xff]
      %v504 = vld [vmem:[%s2 + $0x28] sm:$0xff]
      %v505 = vld [vmem:[%s2 + $0x30] sm:$0xff]
      %v506 = vld [vmem:[%s2 + $0x38] sm:$0xff]
      %v507 = vld [vmem:[%s2 + $0x40] sm:$0xff]
      %v508 = vld [vmem:[%s2 + $0x48] sm:$0xff]
      %v509 = vld [vmem:[%s2 + $0x50] sm:$0xff]
      %v510 = vld [vmem:[%s2 + $0x58] sm:$0xff]
      %v511 = vld [vmem:[%s2 + $0x60] sm:$0xff]
      %v512 = vld [vmem:[%s2 + $0x68] sm:$0xff]
      %v513 = vld [vmem:[%s2 + $0x70] sm:$0xff]
      %v514 = vld [vmem:[%s2 + $0x78] sm:$0xff]
      %v515 = vld [vmem:[%s2 + $0x80] sm:$0xff]
      %v516 = vld [vmem:[%s2 + $0x88] sm:$0xff]
      %v517 = vld [vmem:[%s2 + $0x90] sm:$0xff]
      %v518 = vld [vmem:[%s2 + $0x98] sm:$0xff]
      %v519 = vld [vmem:[%s2 + $0xa0] sm:$0xff]
      %v520 = vld [vmem:[%s2 + $0xa8] sm:$0xff]
      %v521 = vld [vmem:[%s2 + $0xb0] sm:$0xff]
      %v522 = vld [vmem:[%s2 + $0xb8] sm:$0xff]
      %v523 = vld [vmem:[%s2 + $0xc0] sm:$0xff]
      %v524 = vld [vmem:[%s2 + $0xc8] sm:$0xff]
      %v525 = vld [vmem:[%s2 + $0xd0] sm:$0xff]
      %v526 = vld [vmem:[%s2 + $0xd8] sm:$0xff]
      %v527 = vld [vmem:[%s2 + $0xe0] sm:$0xff]
      %v528 = vld [vmem:[%s2 + $0xe8] sm:$0xff]
      %v529 = vld [vmem:[%s2 + $0xf0] sm:$0xff]
      %v530 = vld [vmem:[%s2 + $0xf8] sm:$0xff]
      %v531 = vld [vmem:[%s3] sm:$0x3]
      %v533 = vperm.slane %v531, 0
      %v534 = vperm.slane %v531, 1
      %v539 = vunpack.c.l.b16 %v497
      %v540 = vunpack.c.h.b16 %v497
      %v541 = vunpack.c.l.b16 %v498
      %v542 = vunpack.c.h.b16 %v498
      %v543 = vpack.c.b16 %v541, %v539
      %v544 = vpack.c.b16 %v542, %v540
      %v579 = vunpack.c.l.b16 %v499
      %v580 = vunpack.c.h.b16 %v499
      %v581 = vunpack.c.l.b16 %v500
      %v582 = vunpack.c.h.b16 %v500
      %v583 = vunpack.c.l.b16 %v501
      %v584 = vunpack.c.h.b16 %v501
      %v585 = vunpack.c.l.b16 %v502
      %v586 = vunpack.c.h.b16 %v502
      %v587 = vunpack.c.l.b16 %v503
      %v588 = vunpack.c.h.b16 %v503
      %v589 = vunpack.c.l.b16 %v504
      %v590 = vunpack.c.h.b16 %v504
      %v591 = vunpack.c.l.b16 %v505
      %v592 = vunpack.c.h.b16 %v505
      %v593 = vunpack.c.l.b16 %v506
      %v594 = vunpack.c.h.b16 %v506
      %v595 = vunpack.c.l.b16 %v507
      %v596 = vunpack.c.h.b16 %v507
      %v597 = vunpack.c.l.b16 %v508
      %v598 = vunpack.c.h.b16 %v508
      %v599 = vunpack.c.l.b16 %v509
      %v600 = vunpack.c.h.b16 %v509
      %v601 = vunpack.c.l.b16 %v510
      %v602 = vunpack.c.h.b16 %v510
      %v603 = vunpack.c.l.b16 %v511
      %v604 = vunpack.c.h.b16 %v511
      %v605 = vunpack.c.l.b16 %v512
      %v606 = vunpack.c.h.b16 %v512
      %v607 = vunpack.c.l.b16 %v513
      %v608 = vunpack.c.h.b16 %v513
      %v609 = vunpack.c.l.b16 %v514
      %v610 = vunpack.c.h.b16 %v514
      %v611 = vunpack.c.l.b16 %v515
      %v612 = vunpack.c.h.b16 %v515
      %v613 = vunpack.c.l.b16 %v516
      %v614 = vunpack.c.h.b16 %v516
      %v615 = vunpack.c.l.b16 %v517
      %v616 = vunpack.c.h.b16 %v517
      %v617 = vunpack.c.l.b16 %v518
      %v618 = vunpack.c.h.b16 %v518
      %v619 = vunpack.c.l.b16 %v519
      %v620 = vunpack.c.h.b16 %v519
      %v621 = vunpack.c.l.b16 %v520
      %v622 = vunpack.c.h.b16 %v520
      %v623 = vunpack.c.l.b16 %v521
      %v624 = vunpack.c.h.b16 %v521
      %v625 = vunpack.c.l.b16 %v522
      %v626 = vunpack.c.h.b16 %v522
      %v627 = vunpack.c.l.b16 %v523
      %v628 = vunpack.c.h.b16 %v523
      %v629 = vunpack.c.l.b16 %v524
      %v630 = vunpack.c.h.b16 %v524
      %v631 = vunpack.c.l.b16 %v525
      %v632 = vunpack.c.h.b16 %v525
      %v633 = vunpack.c.l.b16 %v526
      %v634 = vunpack.c.h.b16 %v526
      %v635 = vunpack.c.l.b16 %v527
      %v636 = vunpack.c.h.b16 %v527
      %v637 = vunpack.c.l.b16 %v528
      %v638 = vunpack.c.h.b16 %v528
      %v639 = vunpack.c.l.b16 %v529
      %v640 = vunpack.c.h.b16 %v529
      %v641 = vunpack.c.l.b16 %v530
      %v642 = vunpack.c.h.b16 %v530
      %v643 = vpack.c.b16 %v581, %v579
      %v644 = vpack.c.b16 %v582, %v580
      %v645 = vpack.c.b16 %v585, %v583
      %v646 = vpack.c.b16 %v586, %v584
      %v647 = vpack.c.b16 %v589, %v587
      %v648 = vpack.c.b16 %v590, %v588
      %v649 = vpack.c.b16 %v593, %v591
      %v650 = vpack.c.b16 %v594, %v592
      %v651 = vpack.c.b16 %v597, %v595
      %v652 = vpack.c.b16 %v598, %v596
      %v653 = vpack.c.b16 %v601, %v599
      %v654 = vpack.c.b16 %v602, %v600
      %v655 = vpack.c.b16 %v605, %v603
      %v656 = vpack.c.b16 %v606, %v604
      %v657 = vpack.c.b16 %v609, %v607
      %v658 = vpack.c.b16 %v610, %v608
      %v659 = vpack.c.b16 %v613, %v611
      %v660 = vpack.c.b16 %v614, %v612
      %v661 = vpack.c.b16 %v617, %v615
      %v662 = vpack.c.b16 %v618, %v616
      %v663 = vpack.c.b16 %v621, %v619
      %v664 = vpack.c.b16 %v622, %v620
      %v665 = vpack.c.b16 %v625, %v623
      %v666 = vpack.c.b16 %v626, %v624
      %v667 = vpack.c.b16 %v629, %v627
      %v668 = vpack.c.b16 %v630, %v628
      %v669 = vpack.c.b16 %v633, %v631
      %v670 = vpack.c.b16 %v634, %v632
      %v671 = vpack.c.b16 %v637, %v635
      %v672 = vpack.c.b16 %v638, %v636
      %v673 = vpack.c.b16 %v641, %v639
      %v674 = vpack.c.b16 %v642, %v640
      %707 = vmatpush.bf16.msra.mxu0 %v657
      %708 = vmatpush.bf16.msra.mxu0 %v655
      %709 = vmatpush.bf16.msra.mxu0 %v653
      %710 = vmatpush.bf16.msra.mxu0 %v651
      %711 = vmatpush.bf16.msra.mxu0 %v649
      %712 = vmatpush.bf16.msra.mxu0 %v647
      %713 = vmatpush.bf16.msra.mxu0 %v645
      %714 = vmatpush.bf16.msra.mxu0 %v643
      %715 = vmatmul.bf16.gmra.mxu0 %v543
      %v716 = vpop.f32.mrf.mxu0
      %v717 = vadd.f32 %v533, %v716
      %v718 = vpop.f32.mrf.mxu0
      %v719 = vadd.f32 %v533, %v718
      %720 = vdwg.mxu0
      %721 = vmatpush.bf16.msra.mxu0 %v673
      %722 = vmatpush.bf16.msra.mxu0 %v671
      %723 = vmatpush.bf16.msra.mxu0 %v669
      %724 = vmatpush.bf16.msra.mxu0 %v667
      %725 = vmatpush.bf16.msra.mxu0 %v665
      %726 = vmatpush.bf16.msra.mxu0 %v663
      %727 = vmatpush.bf16.msra.mxu0 %v661
      %728 = vmatpush.bf16.msra.mxu0 %v659
      %729 = vmatmul.bf16.gmra.mxu0 %v544
      %v730 = vpop.f32.mrf.mxu0
      %v731 = vadd.f32 %v717, %v730
      %v732 = vpop.f32.mrf.mxu0
      %v733 = vadd.f32 %v719, %v732
      %734 = vdwg.mxu0
      %735 = vmatpush.bf16.msra.mxu0 %v658
      %736 = vmatpush.bf16.msra.mxu0 %v656
      %737 = vmatpush.bf16.msra.mxu0 %v654
      %738 = vmatpush.bf16.msra.mxu0 %v652
      %739 = vmatpush.bf16.msra.mxu0 %v650
      %740 = vmatpush.bf16.msra.mxu0 %v648
      %741 = vmatpush.bf16.msra.mxu0 %v646
      %742 = vmatpush.bf16.msra.mxu0 %v644
      %743 = vmatmul.bf16.gmra.mxu0 %v543
      %v744 = vpop.f32.mrf.mxu0
      %v745 = vadd.f32 %v534, %v744
      %v746 = vpop.f32.mrf.mxu0
      %v747 = vadd.f32 %v534, %v746
      %748 = vdwg.mxu0
      %749 = vmatpush.bf16.msra.mxu0 %v674
      %750 = vmatpush.bf16.msra.mxu0 %v672
      %751 = vmatpush.bf16.msra.mxu0 %v670
      %752 = vmatpush.bf16.msra.mxu0 %v668
      %753 = vmatpush.bf16.msra.mxu0 %v666
      %754 = vmatpush.bf16.msra.mxu0 %v664
      %755 = vmatpush.bf16.msra.mxu0 %v662
      %756 = vmatpush.bf16.msra.mxu0 %v660
      %757 = vmatmul.bf16.gmra.mxu0 %v544
      %v758 = vpop.f32.mrf.mxu0
      %v759 = vadd.f32 %v745, %v758
      %v760 = vpop.f32.mrf.mxu0
      %v761 = vadd.f32 %v747, %v760
      %762 = vdwg.mxu0
      %v763 = vmax.f32 %v731, 0.0
      %v764 = vmax.f32 %v759, 0.0
      %v765 = vmax.f32 %v733, 0.0
      %v766 = vmax.f32 %v761, 0.0
      %v767 = vld [vmem:[%s4] sm:$0xff]
      %v768 = vld [vmem:[%s4 + $0x8] sm:$0xff]
      %v769 = vld [vmem:[%s4 + $0x10] sm:$0xff]
      %v770 = vld [vmem:[%s4 + $0x18] sm:$0xff]
      %v771 = vld [vmem:[%s4 + $0x20] sm:$0xff]
      %v772 = vld [vmem:[%s4 + $0x28] sm:$0xff]
      %v773 = vld [vmem:[%s4 + $0x30] sm:$0xff]
      %v774 = vld [vmem:[%s4 + $0x38] sm:$0xff]
      %v775 = vld [vmem:[%s4 + $0x40] sm:$0xff]
      %v776 = vld [vmem:[%s4 + $0x48] sm:$0xff]
      %v777 = vld [vmem:[%s4 + $0x50] sm:$0xff]
      %v778 = vld [vmem:[%s4 + $0x58] sm:$0xff]
      %v779 = vld [vmem:[%s4 + $0x60] sm:$0xff]
      %v780 = vld [vmem:[%s4 + $0x68] sm:$0xff]
      %v781 = vld [vmem:[%s4 + $0x70] sm:$0xff]
      %v782 = vld [vmem:[%s4 + $0x78] sm:$0xff]
      %v783 = vld [vmem:[%s4 + $0x80] sm:$0xff]
      %v784 = vld [vmem:[%s4 + $0x88] sm:$0xff]
      %v785 = vld [vmem:[%s4 + $0x90] sm:$0xff]
      %v786 = vld [vmem:[%s4 + $0x98] sm:$0xff]
      %v787 = vld [vmem:[%s4 + $0xa0] sm:$0xff]
      %v788 = vld [vmem:[%s4 + $0xa8] sm:$0xff]
      %v789 = vld [vmem:[%s4 + $0xb0] sm:$0xff]
      %v790 = vld [vmem:[%s4 + $0xb8] sm:$0xff]
      %v791 = vld [vmem:[%s4 + $0xc0] sm:$0xff]
      %v792 = vld [vmem:[%s4 + $0xc8] sm:$0xff]
      %v793 = vld [vmem:[%s4 + $0xd0] sm:$0xff]
      %v794 = vld [vmem:[%s4 + $0xd8] sm:$0xff]
      %v795 = vld [vmem:[%s4 + $0xe0] sm:$0xff]
      %v796 = vld [vmem:[%s4 + $0xe8] sm:$0xff]
      %v797 = vld [vmem:[%s4 + $0xf0] sm:$0xff]
      %v798 = vld [vmem:[%s4 + $0xf8] sm:$0xff]
      %v799 = vld [vmem:[%s5] sm:$0x3]
      %v800 = vpack.c.bf16 %v765, %v763
      %v801 = vpack.c.bf16 %v766, %v764
      %v803 = vperm.slane %v799, 0
      %v804 = vperm.slane %v799, 1
      %v839 = vunpack.c.l.b16 %v767
      %v840 = vunpack.c.h.b16 %v767
      %v841 = vunpack.c.l.b16 %v768
      %v842 = vunpack.c.h.b16 %v768
      %v843 = vunpack.c.l.b16 %v769
      %v844 = vunpack.c.h.b16 %v769
      %v845 = vunpack.c.l.b16 %v770
      %v846 = vunpack.c.h.b16 %v770
      %v847 = vunpack.c.l.b16 %v771
      %v848 = vunpack.c.h.b16 %v771
      %v849 = vunpack.c.l.b16 %v772
      %v850 = vunpack.c.h.b16 %v772
      %v851 = vunpack.c.l.b16 %v773
      %v852 = vunpack.c.h.b16 %v773
      %v853 = vunpack.c.l.b16 %v774
      %v854 = vunpack.c.h.b16 %v774
      %v855 = vunpack.c.l.b16 %v775
      %v856 = vunpack.c.h.b16 %v775
      %v857 = vunpack.c.l.b16 %v776
      %v858 = vunpack.c.h.b16 %v776
      %v859 = vunpack.c.l.b16 %v777
      %v860 = vunpack.c.h.b16 %v777
      %v861 = vunpack.c.l.b16 %v778
      %v862 = vunpack.c.h.b16 %v778
      %v863 = vunpack.c.l.b16 %v779
      %v864 = vunpack.c.h.b16 %v779
      %v865 = vunpack.c.l.b16 %v780
      %v866 = vunpack.c.h.b16 %v780
      %v867 = vunpack.c.l.b16 %v781
      %v868 = vunpack.c.h.b16 %v781
      %v869 = vunpack.c.l.b16 %v782
      %v870 = vunpack.c.h.b16 %v782
      %v871 = vunpack.c.l.b16 %v783
      %v872 = vunpack.c.h.b16 %v783
      %v873 = vunpack.c.l.b16 %v784
      %v874 = vunpack.c.h.b16 %v784
      %v875 = vunpack.c.l.b16 %v785
      %v876 = vunpack.c.h.b16 %v785
      %v877 = vunpack.c.l.b16 %v786
      %v878 = vunpack.c.h.b16 %v786
      %v879 = vunpack.c.l.b16 %v787
      %v880 = vunpack.c.h.b16 %v787
      %v881 = vunpack.c.l.b16 %v788
      %v882 = vunpack.c.h.b16 %v788
      %v883 = vunpack.c.l.b16 %v789
      %v884 = vunpack.c.h.b16 %v789
      %v885 = vunpack.c.l.b16 %v790
      %v886 = vunpack.c.h.b16 %v790
      %v887 = vunpack.c.l.b16 %v791
      %v888 = vunpack.c.h.b16 %v791
      %v889 = vunpack.c.l.b16 %v792
      %v890 = vunpack.c.h.b16 %v792
      %v891 = vunpack.c.l.b16 %v793
      %v892 = vunpack.c.h.b16 %v793
      %v893 = vunpack.c.l.b16 %v794
      %v894 = vunpack.c.h.b16 %v794
      %v895 = vunpack.c.l.b16 %v795
      %v896 = vunpack.c.h.b16 %v795
      %v897 = vunpack.c.l.b16 %v796
      %v898 = vunpack.c.h.b16 %v796
      %v899 = vunpack.c.l.b16 %v797
      %v900 = vunpack.c.h.b16 %v797
      %v901 = vunpack.c.l.b16 %v798
      %v902 = vunpack.c.h.b16 %v798
      %v903 = vpack.c.b16 %v841, %v839
      %v904 = vpack.c.b16 %v842, %v840
      %v905 = vpack.c.b16 %v845, %v843
      %v906 = vpack.c.b16 %v846, %v844
      %v907 = vpack.c.b16 %v849, %v847
      %v908 = vpack.c.b16 %v850, %v848
      %v909 = vpack.c.b16 %v853, %v851
      %v910 = vpack.c.b16 %v854, %v852
      %v911 = vpack.c.b16 %v857, %v855
      %v912 = vpack.c.b16 %v858, %v856
      %v913 = vpack.c.b16 %v861, %v859
      %v914 = vpack.c.b16 %v862, %v860
      %v915 = vpack.c.b16 %v865, %v863
      %v916 = vpack.c.b16 %v866, %v864
      %v917 = vpack.c.b16 %v869, %v867
      %v918 = vpack.c.b16 %v870, %v868
      %v919 = vpack.c.b16 %v873, %v871
      %v920 = vpack.c.b16 %v874, %v872
      %v921 = vpack.c.b16 %v877, %v875
      %v922 = vpack.c.b16 %v878, %v876
      %v923 = vpack.c.b16 %v881, %v879
      %v924 = vpack.c.b16 %v882, %v880
      %v925 = vpack.c.b16 %v885, %v883
      %v926 = vpack.c.b16 %v886, %v884
      %v927 = vpack.c.b16 %v889, %v887
      %v928 = vpack.c.b16 %v890, %v888
      %v929 = vpack.c.b16 %v893, %v891
      %v930 = vpack.c.b16 %v894, %v892
      %v931 = vpack.c.b16 %v897, %v895
      %v932 = vpack.c.b16 %v898, %v896
      %v933 = vpack.c.b16 %v901, %v899
      %v934 = vpack.c.b16 %v902, %v900
      %967 = vmatpush.bf16.msra.mxu0 %v917
      %968 = vmatpush.bf16.msra.mxu0 %v915
      %969 = vmatpush.bf16.msra.mxu0 %v913
      %970 = vmatpush.bf16.msra.mxu0 %v911
      %971 = vmatpush.bf16.msra.mxu0 %v909
      %972 = vmatpush.bf16.msra.mxu0 %v907
      %973 = vmatpush.bf16.msra.mxu0 %v905
      %974 = vmatpush.bf16.msra.mxu0 %v903
      %975 = vmatmul.bf16.gmra.mxu0 %v800
      %v976 = vpop.f32.mrf.mxu0
      %v977 = vadd.f32 %v803, %v976
      %v978 = vpop.f32.mrf.mxu0
      %v979 = vadd.f32 %v803, %v978
      %980 = vdwg.mxu0
      %981 = vmatpush.bf16.msra.mxu0 %v933
      %982 = vmatpush.bf16.msra.mxu0 %v931
      %983 = vmatpush.bf16.msra.mxu0 %v929
      %984 = vmatpush.bf16.msra.mxu0 %v927
      %985 = vmatpush.bf16.msra.mxu0 %v925
      %986 = vmatpush.bf16.msra.mxu0 %v923
      %987 = vmatpush.bf16.msra.mxu0 %v921
      %988 = vmatpush.bf16.msra.mxu0 %v919
      %989 = vmatmul.bf16.gmra.mxu0 %v801
      %v990 = vpop.f32.mrf.mxu0
      %v991 = vadd.f32 %v977, %v990
      %v992 = vpop.f32.mrf.mxu0
      %v993 = vadd.f32 %v979, %v992
      %994 = vdwg.mxu0
      %995 = vmatpush.bf16.msra.mxu0 %v918
      %996 = vmatpush.bf16.msra.mxu0 %v916
      %997 = vmatpush.bf16.msra.mxu0 %v914
      %998 = vmatpush.bf16.msra.mxu0 %v912
      %999 = vmatpush.bf16.msra.mxu0 %v910
      %1000 = vmatpush.bf16.msra.mxu0 %v908
      %1001 = vmatpush.bf16.msra.mxu0 %v906
      %1002 = vmatpush.bf16.msra.mxu0 %v904
      %1003 = vmatmul.bf16.gmra.mxu0 %v800
      %v1004 = vpop.f32.mrf.mxu0
      %v1005 = vadd.f32 %v804, %v1004
      %v1006 = vpop.f32.mrf.mxu0
      %v1007 = vadd.f32 %v804, %v1006
      %1008 = vdwg.mxu0
      %1009 = vmatpush.bf16.msra.mxu0 %v934
      %1010 = vmatpush.bf16.msra.mxu0 %v932
      %1011 = vmatpush.bf16.msra.mxu0 %v930
      %1012 = vmatpush.bf16.msra.mxu0 %v928
      %1013 = vmatpush.bf16.msra.mxu0 %v926
      %1014 = vmatpush.bf16.msra.mxu0 %v924
      %1015 = vmatpush.bf16.msra.mxu0 %v922
      %1016 = vmatpush.bf16.msra.mxu0 %v920
      %1017 = vmatmul.bf16.gmra.mxu0 %v801
      %v1018 = vpop.f32.mrf.mxu0
      %v1019 = vadd.f32 %v1005, %v1018
      %v1020 = vpop.f32.mrf.mxu0
      %v1021 = vadd.f32 %v1007, %v1020
      %1022 = vdwg.mxu0
      %v1023 = vmax.f32 %v991, 0.0
      %v1024 = vmax.f32 %v1019, 0.0
      %v1025 = vmax.f32 %v993, 0.0
      %v1026 = vmax.f32 %v1021, 0.0
      %v1027 = vld [vmem:[%s6] sm:$0xff]
      %v1028 = vld [vmem:[%s6 + $0x8] sm:$0xff]
      %v1029 = vld [vmem:[%s6 + $0x10] sm:$0xff]
      %v1030 = vld [vmem:[%s6 + $0x18] sm:$0xff]
      %v1031 = vld [vmem:[%s6 + $0x20] sm:$0xff]
      %v1032 = vld [vmem:[%s6 + $0x28] sm:$0xff]
      %v1033 = vld [vmem:[%s6 + $0x30] sm:$0xff]
      %v1034 = vld [vmem:[%s6 + $0x38] sm:$0xff]
      %v1035 = vld [vmem:[%s6 + $0x40] sm:$0xff]
      %v1036 = vld [vmem:[%s6 + $0x48] sm:$0xff]
      %v1037 = vld [vmem:[%s6 + $0x50] sm:$0xff]
      %v1038 = vld [vmem:[%s6 + $0x58] sm:$0xff]
      %v1039 = vld [vmem:[%s6 + $0x60] sm:$0xff]
      %v1040 = vld [vmem:[%s6 + $0x68] sm:$0xff]
      %v1041 = vld [vmem:[%s6 + $0x70] sm:$0xff]
      %v1042 = vld [vmem:[%s6 + $0x78] sm:$0xff]
      %v1043 = vld [vmem:[%s6 + $0x80] sm:$0xff]
      %v1044 = vld [vmem:[%s6 + $0x88] sm:$0xff]
      %v1045 = vld [vmem:[%s6 + $0x90] sm:$0xff]
      %v1046 = vld [vmem:[%s6 + $0x98] sm:$0xff]
      %v1047 = vld [vmem:[%s6 + $0xa0] sm:$0xff]
      %v1048 = vld [vmem:[%s6 + $0xa8] sm:$0xff]
      %v1049 = vld [vmem:[%s6 + $0xb0] sm:$0xff]
      %v1050 = vld [vmem:[%s6 + $0xb8] sm:$0xff]
      %v1051 = vld [vmem:[%s6 + $0xc0] sm:$0xff]
      %v1052 = vld [vmem:[%s6 + $0xc8] sm:$0xff]
      %v1053 = vld [vmem:[%s6 + $0xd0] sm:$0xff]
      %v1054 = vld [vmem:[%s6 + $0xd8] sm:$0xff]
      %v1055 = vld [vmem:[%s6 + $0xe0] sm:$0xff]
      %v1056 = vld [vmem:[%s6 + $0xe8] sm:$0xff]
      %v1057 = vld [vmem:[%s6 + $0xf0] sm:$0xff]
      %v1058 = vld [vmem:[%s6 + $0xf8] sm:$0xff]
      %v1059 = vld [vmem:[%s7] sm:$0x3]
      %v1060 = vpack.c.bf16 %v1025, %v1023
      %v1061 = vpack.c.bf16 %v1026, %v1024
      %v1063 = vperm.slane %v1059, 0
      %v1064 = vperm.slane %v1059, 1
      %v1099 = vunpack.c.l.b16 %v1027
      %v1100 = vunpack.c.h.b16 %v1027
      %v1101 = vunpack.c.l.b16 %v1028
      %v1102 = vunpack.c.h.b16 %v1028
      %v1103 = vunpack.c.l.b16 %v1029
      %v1104 = vunpack.c.h.b16 %v1029
      %v1105 = vunpack.c.l.b16 %v1030
      %v1106 = vunpack.c.h.b16 %v1030
      %v1107 = vunpack.c.l.b16 %v1031
      %v1108 = vunpack.c.h.b16 %v1031
      %v1109 = vunpack.c.l.b16 %v1032
      %v1110 = vunpack.c.h.b16 %v1032
      %v1111 = vunpack.c.l.b16 %v1033
      %v1112 = vunpack.c.h.b16 %v1033
      %v1113 = vunpack.c.l.b16 %v1034
      %v1114 = vunpack.c.h.b16 %v1034
      %v1115 = vunpack.c.l.b16 %v1035
      %v1116 = vunpack.c.h.b16 %v1035
      %v1117 = vunpack.c.l.b16 %v1036
      %v1118 = vunpack.c.h.b16 %v1036
      %v1119 = vunpack.c.l.b16 %v1037
      %v1120 = vunpack.c.h.b16 %v1037
      %v1121 = vunpack.c.l.b16 %v1038
      %v1122 = vunpack.c.h.b16 %v1038
      %v1123 = vunpack.c.l.b16 %v1039
      %v1124 = vunpack.c.h.b16 %v1039
      %v1125 = vunpack.c.l.b16 %v1040
      %v1126 = vunpack.c.h.b16 %v1040
      %v1127 = vunpack.c.l.b16 %v1041
      %v1128 = vunpack.c.h.b16 %v1041
      %v1129 = vunpack.c.l.b16 %v1042
      %v1130 = vunpack.c.h.b16 %v1042
      %v1131 = vunpack.c.l.b16 %v1043
      %v1132 = vunpack.c.h.b16 %v1043
      %v1133 = vunpack.c.l.b16 %v1044
      %v1134 = vunpack.c.h.b16 %v1044
      %v1135 = vunpack.c.l.b16 %v1045
      %v1136 = vunpack.c.h.b16 %v1045
      %v1137 = vunpack.c.l.b16 %v1046
      %v1138 = vunpack.c.h.b16 %v1046
      %v1139 = vunpack.c.l.b16 %v1047
      %v1140 = vunpack.c.h.b16 %v1047
      %v1141 = vunpack.c.l.b16 %v1048
      %v1142 = vunpack.c.h.b16 %v1048
      %v1143 = vunpack.c.l.b16 %v1049
      %v1144 = vunpack.c.h.b16 %v1049
      %v1145 = vunpack.c.l.b16 %v1050
      %v1146 = vunpack.c.h.b16 %v1050
      %v1147 = vunpack.c.l.b16 %v1051
      %v1148 = vunpack.c.h.b16 %v1051
      %v1149 = vunpack.c.l.b16 %v1052
      %v1150 = vunpack.c.h.b16 %v1052
      %v1151 = vunpack.c.l.b16 %v1053
      %v1152 = vunpack.c.h.b16 %v1053
      %v1153 = vunpack.c.l.b16 %v1054
      %v1154 = vunpack.c.h.b16 %v1054
      %v1155 = vunpack.c.l.b16 %v1055
      %v1156 = vunpack.c.h.b16 %v1055
      %v1157 = vunpack.c.l.b16 %v1056
      %v1158 = vunpack.c.h.b16 %v1056
      %v1159 = vunpack.c.l.b16 %v1057
      %v1160 = vunpack.c.h.b16 %v1057
      %v1161 = vunpack.c.l.b16 %v1058
      %v1162 = vunpack.c.h.b16 %v1058
      %v1163 = vpack.c.b16 %v1101, %v1099
      %v1164 = vpack.c.b16 %v1102, %v1100
      %v1165 = vpack.c.b16 %v1105, %v1103
      %v1166 = vpack.c.b16 %v1106, %v1104
      %v1167 = vpack.c.b16 %v1109, %v1107
      %v1168 = vpack.c.b16 %v1110, %v1108
      %v1169 = vpack.c.b16 %v1113, %v1111
      %v1170 = vpack.c.b16 %v1114, %v1112
      %v1171 = vpack.c.b16 %v1117, %v1115
      %v1172 = vpack.c.b16 %v1118, %v1116
      %v1173 = vpack.c.b16 %v1121, %v1119
      %v1174 = vpack.c.b16 %v1122, %v1120
      %v1175 = vpack.c.b16 %v1125, %v1123
      %v1176 = vpack.c.b16 %v1126, %v1124
      %v1177 = vpack.c.b16 %v1129, %v1127
      %v1178 = vpack.c.b16 %v1130, %v1128
      %v1179 = vpack.c.b16 %v1133, %v1131
      %v1180 = vpack.c.b16 %v1134, %v1132
      %v1181 = vpack.c.b16 %v1137, %v1135
      %v1182 = vpack.c.b16 %v1138, %v1136
      %v1183 = vpack.c.b16 %v1141, %v1139
      %v1184 = vpack.c.b16 %v1142, %v1140
      %v1185 = vpack.c.b16 %v1145, %v1143
      %v1186 = vpack.c.b16 %v1146, %v1144
      %v1187 = vpack.c.b16 %v1149, %v1147
      %v1188 = vpack.c.b16 %v1150, %v1148
      %v1189 = vpack.c.b16 %v1153, %v1151
      %v1190 = vpack.c.b16 %v1154, %v1152
      %v1191 = vpack.c.b16 %v1157, %v1155
      %v1192 = vpack.c.b16 %v1158, %v1156
      %v1193 = vpack.c.b16 %v1161, %v1159
      %v1194 = vpack.c.b16 %v1162, %v1160
      %1227 = vmatpush.bf16.msra.mxu0 %v1177
      %1228 = vmatpush.bf16.msra.mxu0 %v1175
      %1229 = vmatpush.bf16.msra.mxu0 %v1173
      %1230 = vmatpush.bf16.msra.mxu0 %v1171
      %1231 = vmatpush.bf16.msra.mxu0 %v1169
      %1232 = vmatpush.bf16.msra.mxu0 %v1167
      %1233 = vmatpush.bf16.msra.mxu0 %v1165
      %1234 = vmatpush.bf16.msra.mxu0 %v1163
      %1235 = vmatmul.bf16.gmra.mxu0 %v1060
      %v1236 = vpop.f32.mrf.mxu0
      %v1237 = vadd.f32 %v1063, %v1236
      %v1238 = vpop.f32.mrf.mxu0
      %v1239 = vadd.f32 %v1063, %v1238
      %1240 = vdwg.mxu0
      %1241 = vmatpush.bf16.msra.mxu0 %v1193
      %1242 = vmatpush.bf16.msra.mxu0 %v1191
      %1243 = vmatpush.bf16.msra.mxu0 %v1189
      %1244 = vmatpush.bf16.msra.mxu0 %v1187
      %1245 = vmatpush.bf16.msra.mxu0 %v1185
      %1246 = vmatpush.bf16.msra.mxu0 %v1183
      %1247 = vmatpush.bf16.msra.mxu0 %v1181
      %1248 = vmatpush.bf16.msra.mxu0 %v1179
      %1249 = vmatmul.bf16.gmra.mxu0 %v1061
      %v1250 = vpop.f32.mrf.mxu0
      %v1251 = vadd.f32 %v1237, %v1250
      %v1252 = vpop.f32.mrf.mxu0
      %v1253 = vadd.f32 %v1239, %v1252
      %1254 = vdwg.mxu0
      %1255 = vmatpush.bf16.msra.mxu0 %v1178
      %1256 = vmatpush.bf16.msra.mxu0 %v1176
      %1257 = vmatpush.bf16.msra.mxu0 %v1174
      %1258 = vmatpush.bf16.msra.mxu0 %v1172
      %1259 = vmatpush.bf16.msra.mxu0 %v1170
      %1260 = vmatpush.bf16.msra.mxu0 %v1168
      %1261 = vmatpush.bf16.msra.mxu0 %v1166
      %1262 = vmatpush.bf16.msra.mxu0 %v1164
      %1263 = vmatmul.bf16.gmra.mxu0 %v1060
      %v1264 = vpop.f32.mrf.mxu0
      %v1265 = vadd.f32 %v1064, %v1264
      %v1266 = vpop.f32.mrf.mxu0
      %v1267 = vadd.f32 %v1064, %v1266
      %1268 = vdwg.mxu0
      %1269 = vmatpush.bf16.msra.mxu0 %v1194
      %1270 = vmatpush.bf16.msra.mxu0 %v1192
      %1271 = vmatpush.bf16.msra.mxu0 %v1190
      %1272 = vmatpush.bf16.msra.mxu0 %v1188
      %1273 = vmatpush.bf16.msra.mxu0 %v1186
      %1274 = vmatpush.bf16.msra.mxu0 %v1184
      %1275 = vmatpush.bf16.msra.mxu0 %v1182
      %1276 = vmatpush.bf16.msra.mxu0 %v1180
      %1277 = vmatmul.bf16.gmra.mxu0 %v1061
      %v1278 = vpop.f32.mrf.mxu0
      %v1279 = vadd.f32 %v1265, %v1278
      %v1280 = vpop.f32.mrf.mxu0
      %v1281 = vadd.f32 %v1267, %v1280
      %1282 = vdwg.mxu0
      %v1283 = vmax.f32 %v1251, 0.0
      %v1284 = vmax.f32 %v1279, 0.0
      %v1285 = vmax.f32 %v1253, 0.0
      %v1286 = vmax.f32 %v1281, 0.0
      %v1287 = vadd.f32 %v763, %v1283
      %v1288 = vadd.f32 %v764, %v1284
      %v1289 = vadd.f32 %v765, %v1285
      %v1290 = vadd.f32 %v766, %v1286
      %s1291 = scalar_lea.vmem %s4, 256
      %v1292 = vld [vmem:[%s1291] sm:$0xff]
      %v1293 = vld [vmem:[%s1291 + $0x8] sm:$0xff]
      %v1294 = vld [vmem:[%s1291 + $0x10] sm:$0xff]
      %v1295 = vld [vmem:[%s1291 + $0x18] sm:$0xff]
      %v1296 = vld [vmem:[%s1291 + $0x20] sm:$0xff]
      %v1297 = vld [vmem:[%s1291 + $0x28] sm:$0xff]
      %v1298 = vld [vmem:[%s1291 + $0x30] sm:$0xff]
      %v1299 = vld [vmem:[%s1291 + $0x38] sm:$0xff]
      %v1300 = vld [vmem:[%s1291 + $0x40] sm:$0xff]
      %v1301 = vld [vmem:[%s1291 + $0x48] sm:$0xff]
      %v1302 = vld [vmem:[%s1291 + $0x50] sm:$0xff]
      %v1303 = vld [vmem:[%s1291 + $0x58] sm:$0xff]
      %v1304 = vld [vmem:[%s1291 + $0x60] sm:$0xff]
      %v1305 = vld [vmem:[%s1291 + $0x68] sm:$0xff]
      %v1306 = vld [vmem:[%s1291 + $0x70] sm:$0xff]
      %v1307 = vld [vmem:[%s1291 + $0x78] sm:$0xff]
      %v1308 = vld [vmem:[%s1291 + $0x80] sm:$0xff]
      %v1309 = vld [vmem:[%s1291 + $0x88] sm:$0xff]
      %v1310 = vld [vmem:[%s1291 + $0x90] sm:$0xff]
      %v1311 = vld [vmem:[%s1291 + $0x98] sm:$0xff]
      %v1312 = vld [vmem:[%s1291 + $0xa0] sm:$0xff]
      %v1313 = vld [vmem:[%s1291 + $0xa8] sm:$0xff]
      %v1314 = vld [vmem:[%s1291 + $0xb0] sm:$0xff]
      %v1315 = vld [vmem:[%s1291 + $0xb8] sm:$0xff]
      %v1316 = vld [vmem:[%s1291 + $0xc0] sm:$0xff]
      %v1317 = vld [vmem:[%s1291 + $0xc8] sm:$0xff]
      %v1318 = vld [vmem:[%s1291 + $0xd0] sm:$0xff]
      %v1319 = vld [vmem:[%s1291 + $0xd8] sm:$0xff]
      %v1320 = vld [vmem:[%s1291 + $0xe0] sm:$0xff]
      %v1321 = vld [vmem:[%s1291 + $0xe8] sm:$0xff]
      %v1322 = vld [vmem:[%s1291 + $0xf0] sm:$0xff]
      %v1323 = vld [vmem:[%s1291 + $0xf8] sm:$0xff]
      %s1324 = scalar_lea.vmem %s5, 2
      %v1325 = vld [vmem:[%s1324] sm:$0x3]
      %v1326 = vpack.c.bf16 %v1289, %v1287
      %v1327 = vpack.c.bf16 %v1290, %v1288
      %v1329 = vperm.slane %v1325, 0
      %v1330 = vperm.slane %v1325, 1
      %v1365 = vunpack.c.l.b16 %v1292
      %v1366 = vunpack.c.h.b16 %v1292
      %v1367 = vunpack.c.l.b16 %v1293
      %v1368 = vunpack.c.h.b16 %v1293
      %v1369 = vunpack.c.l.b16 %v1294
      %v1370 = vunpack.c.h.b16 %v1294
      %v1371 = vunpack.c.l.b16 %v1295
      %v1372 = vunpack.c.h.b16 %v1295
      %v1373 = vunpack.c.l.b16 %v1296
      %v1374 = vunpack.c.h.b16 %v1296
      %v1375 = vunpack.c.l.b16 %v1297
      %v1376 = vunpack.c.h.b16 %v1297
      %v1377 = vunpack.c.l.b16 %v1298
      %v1378 = vunpack.c.h.b16 %v1298
      %v1379 = vunpack.c.l.b16 %v1299
      %v1380 = vunpack.c.h.b16 %v1299
      %v1381 = vunpack.c.l.b16 %v1300
      %v1382 = vunpack.c.h.b16 %v1300
      %v1383 = vunpack.c.l.b16 %v1301
      %v1384 = vunpack.c.h.b16 %v1301
      %v1385 = vunpack.c.l.b16 %v1302
      %v1386 = vunpack.c.h.b16 %v1302
      %v1387 = vunpack.c.l.b16 %v1303
      %v1388 = vunpack.c.h.b16 %v1303
      %v1389 = vunpack.c.l.b16 %v1304
      %v1390 = vunpack.c.h.b16 %v1304
      %v1391 = vunpack.c.l.b16 %v1305
      %v1392 = vunpack.c.h.b16 %v1305
      %v1393 = vunpack.c.l.b16 %v1306
      %v1394 = vunpack.c.h.b16 %v1306
      %v1395 = vunpack.c.l.b16 %v1307
      %v1396 = vunpack.c.h.b16 %v1307
      %v1397 = vunpack.c.l.b16 %v1308
      %v1398 = vunpack.c.h.b16 %v1308
      %v1399 = vunpack.c.l.b16 %v1309
      %v1400 = vunpack.c.h.b16 %v1309
      %v1401 = vunpack.c.l.b16 %v1310
      %v1402 = vunpack.c.h.b16 %v1310
      %v1403 = vunpack.c.l.b16 %v1311
      %v1404 = vunpack.c.h.b16 %v1311
      %v1405 = vunpack.c.l.b16 %v1312
      %v1406 = vunpack.c.h.b16 %v1312
      %v1407 = vunpack.c.l.b16 %v1313
      %v1408 = vunpack.c.h.b16 %v1313
      %v1409 = vunpack.c.l.b16 %v1314
      %v1410 = vunpack.c.h.b16 %v1314
      %v1411 = vunpack.c.l.b16 %v1315
      %v1412 = vunpack.c.h.b16 %v1315
      %v1413 = vunpack.c.l.b16 %v1316
      %v1414 = vunpack.c.h.b16 %v1316
      %v1415 = vunpack.c.l.b16 %v1317
      %v1416 = vunpack.c.h.b16 %v1317
      %v1417 = vunpack.c.l.b16 %v1318
      %v1418 = vunpack.c.h.b16 %v1318
      %v1419 = vunpack.c.l.b16 %v1319
      %v1420 = vunpack.c.h.b16 %v1319
      %v1421 = vunpack.c.l.b16 %v1320
      %v1422 = vunpack.c.h.b16 %v1320
      %v1423 = vunpack.c.l.b16 %v1321
      %v1424 = vunpack.c.h.b16 %v1321
      %v1425 = vunpack.c.l.b16 %v1322
      %v1426 = vunpack.c.h.b16 %v1322
      %v1427 = vunpack.c.l.b16 %v1323
      %v1428 = vunpack.c.h.b16 %v1323
      %v1429 = vpack.c.b16 %v1367, %v1365
      %v1430 = vpack.c.b16 %v1368, %v1366
      %v1431 = vpack.c.b16 %v1371, %v1369
      %v1432 = vpack.c.b16 %v1372, %v1370
      %v1433 = vpack.c.b16 %v1375, %v1373
      %v1434 = vpack.c.b16 %v1376, %v1374
      %v1435 = vpack.c.b16 %v1379, %v1377
      %v1436 = vpack.c.b16 %v1380, %v1378
      %v1437 = vpack.c.b16 %v1383, %v1381
      %v1438 = vpack.c.b16 %v1384, %v1382
      %v1439 = vpack.c.b16 %v1387, %v1385
      %v1440 = vpack.c.b16 %v1388, %v1386
      %v1441 = vpack.c.b16 %v1391, %v1389
      %v1442 = vpack.c.b16 %v1392, %v1390
      %v1443 = vpack.c.b16 %v1395, %v1393
      %v1444 = vpack.c.b16 %v1396, %v1394
      %v1445 = vpack.c.b16 %v1399, %v1397
      %v1446 = vpack.c.b16 %v1400, %v1398
      %v1447 = vpack.c.b16 %v1403, %v1401
      %v1448 = vpack.c.b16 %v1404, %v1402
      %v1449 = vpack.c.b16 %v1407, %v1405
      %v1450 = vpack.c.b16 %v1408, %v1406
      %v1451 = vpack.c.b16 %v1411, %v1409
      %v1452 = vpack.c.b16 %v1412, %v1410
      %v1453 = vpack.c.b16 %v1415, %v1413
      %v1454 = vpack.c.b16 %v1416, %v1414
      %v1455 = vpack.c.b16 %v1419, %v1417
      %v1456 = vpack.c.b16 %v1420, %v1418
      %v1457 = vpack.c.b16 %v1423, %v1421
      %v1458 = vpack.c.b16 %v1424, %v1422
      %v1459 = vpack.c.b16 %v1427, %v1425
      %v1460 = vpack.c.b16 %v1428, %v1426
      %1493 = vmatpush.bf16.msra.mxu0 %v1443
      %1494 = vmatpush.bf16.msra.mxu0 %v1441
      %1495 = vmatpush.bf16.msra.mxu0 %v1439
      %1496 = vmatpush.bf16.msra.mxu0 %v1437
      %1497 = vmatpush.bf16.msra.mxu0 %v1435
      %1498 = vmatpush.bf16.msra.mxu0 %v1433
      %1499 = vmatpush.bf16.msra.mxu0 %v1431
      %1500 = vmatpush.bf16.msra.mxu0 %v1429
      %1501 = vmatmul.bf16.gmra.mxu0 %v1326
      %v1502 = vpop.f32.mrf.mxu0
      %v1503 = vadd.f32 %v1329, %v1502
      %v1504 = vpop.f32.mrf.mxu0
      %v1505 = vadd.f32 %v1329, %v1504
      %1506 = vdwg.mxu0
      %1507 = vmatpush.bf16.msra.mxu0 %v1459
      %1508 = vmatpush.bf16.msra.mxu0 %v1457
      %1509 = vmatpush.bf16.msra.mxu0 %v1455
      %1510 = vmatpush.bf16.msra.mxu0 %v1453
      %1511 = vmatpush.bf16.msra.mxu0 %v1451
      %1512 = vmatpush.bf16.msra.mxu0 %v1449
      %1513 = vmatpush.bf16.msra.mxu0 %v1447
      %1514 = vmatpush.bf16.msra.mxu0 %v1445
      %1515 = vmatmul.bf16.gmra.mxu0 %v1327
      %v1516 = vpop.f32.mrf.mxu0
      %v1517 = vadd.f32 %v1503, %v1516
      %v1518 = vpop.f32.mrf.mxu0
      %v1519 = vadd.f32 %v1505, %v1518
      %1520 = vdwg.mxu0
      %1521 = vmatpush.bf16.msra.mxu0 %v1444
      %1522 = vmatpush.bf16.msra.mxu0 %v1442
      %1523 = vmatpush.bf16.msra.mxu0 %v1440
      %1524 = vmatpush.bf16.msra.mxu0 %v1438
      %1525 = vmatpush.bf16.msra.mxu0 %v1436
      %1526 = vmatpush.bf16.msra.mxu0 %v1434
      %1527 = vmatpush.bf16.msra.mxu0 %v1432
      %1528 = vmatpush.bf16.msra.mxu0 %v1430
      %1529 = vmatmul.bf16.gmra.mxu0 %v1326
      %v1530 = vpop.f32.mrf.mxu0
      %v1531 = vadd.f32 %v1330, %v1530
      %v1532 = vpop.f32.mrf.mxu0
      %v1533 = vadd.f32 %v1330, %v1532
      %1534 = vdwg.mxu0
      %1535 = vmatpush.bf16.msra.mxu0 %v1460
      %1536 = vmatpush.bf16.msra.mxu0 %v1458
      %1537 = vmatpush.bf16.msra.mxu0 %v1456
      %1538 = vmatpush.bf16.msra.mxu0 %v1454
      %1539 = vmatpush.bf16.msra.mxu0 %v1452
      %1540 = vmatpush.bf16.msra.mxu0 %v1450
      %1541 = vmatpush.bf16.msra.mxu0 %v1448
      %1542 = vmatpush.bf16.msra.mxu0 %v1446
      %1543 = vmatmul.bf16.gmra.mxu0 %v1327
      %v1544 = vpop.f32.mrf.mxu0
      %v1545 = vadd.f32 %v1531, %v1544
      %v1546 = vpop.f32.mrf.mxu0
      %v1547 = vadd.f32 %v1533, %v1546
      %1548 = vdwg.mxu0
      %v1549 = vmax.f32 %v1517, 0.0
      %v1550 = vmax.f32 %v1545, 0.0
      %v1551 = vmax.f32 %v1519, 0.0
      %v1552 = vmax.f32 %v1547, 0.0
      %s1553 = scalar_lea.vmem %s6, 256
      %v1554 = vld [vmem:[%s1553] sm:$0xff]
      %v1555 = vld [vmem:[%s1553 + $0x8] sm:$0xff]
      %v1556 = vld [vmem:[%s1553 + $0x10] sm:$0xff]
      %v1557 = vld [vmem:[%s1553 + $0x18] sm:$0xff]
      %v1558 = vld [vmem:[%s1553 + $0x20] sm:$0xff]
      %v1559 = vld [vmem:[%s1553 + $0x28] sm:$0xff]
      %v1560 = vld [vmem:[%s1553 + $0x30] sm:$0xff]
      %v1561 = vld [vmem:[%s1553 + $0x38] sm:$0xff]
      %v1562 = vld [vmem:[%s1553 + $0x40] sm:$0xff]
      %v1563 = vld [vmem:[%s1553 + $0x48] sm:$0xff]
      %v1564 = vld [vmem:[%s1553 + $0x50] sm:$0xff]
      %v1565 = vld [vmem:[%s1553 + $0x58] sm:$0xff]
      %v1566 = vld [vmem:[%s1553 + $0x60] sm:$0xff]
      %v1567 = vld [vmem:[%s1553 + $0x68] sm:$0xff]
      %v1568 = vld [vmem:[%s1553 + $0x70] sm:$0xff]
      %v1569 = vld [vmem:[%s1553 + $0x78] sm:$0xff]
      %v1570 = vld [vmem:[%s1553 + $0x80] sm:$0xff]
      %v1571 = vld [vmem:[%s1553 + $0x88] sm:$0xff]
      %v1572 = vld [vmem:[%s1553 + $0x90] sm:$0xff]
      %v1573 = vld [vmem:[%s1553 + $0x98] sm:$0xff]
      %v1574 = vld [vmem:[%s1553 + $0xa0] sm:$0xff]
      %v1575 = vld [vmem:[%s1553 + $0xa8] sm:$0xff]
      %v1576 = vld [vmem:[%s1553 + $0xb0] sm:$0xff]
      %v1577 = vld [vmem:[%s1553 + $0xb8] sm:$0xff]
      %v1578 = vld [vmem:[%s1553 + $0xc0] sm:$0xff]
      %v1579 = vld [vmem:[%s1553 + $0xc8] sm:$0xff]
      %v1580 = vld [vmem:[%s1553 + $0xd0] sm:$0xff]
      %v1581 = vld [vmem:[%s1553 + $0xd8] sm:$0xff]
      %v1582 = vld [vmem:[%s1553 + $0xe0] sm:$0xff]
      %v1583 = vld [vmem:[%s1553 + $0xe8] sm:$0xff]
      %v1584 = vld [vmem:[%s1553 + $0xf0] sm:$0xff]
      %v1585 = vld [vmem:[%s1553 + $0xf8] sm:$0xff]
      %s1586 = scalar_lea.vmem %s7, 2
      %v1587 = vld [vmem:[%s1586] sm:$0x3]
      %v1588 = vpack.c.bf16 %v1551, %v1549
      %v1589 = vpack.c.bf16 %v1552, %v1550
      %v1591 = vperm.slane %v1587, 0
      %v1592 = vperm.slane %v1587, 1
      %v1627 = vunpack.c.l.b16 %v1554
      %v1628 = vunpack.c.h.b16 %v1554
      %v1629 = vunpack.c.l.b16 %v1555
      %v1630 = vunpack.c.h.b16 %v1555
      %v1631 = vunpack.c.l.b16 %v1556
      %v1632 = vunpack.c.h.b16 %v1556
      %v1633 = vunpack.c.l.b16 %v1557
      %v1634 = vunpack.c.h.b16 %v1557
      %v1635 = vunpack.c.l.b16 %v1558
      %v1636 = vunpack.c.h.b16 %v1558
      %v1637 = vunpack.c.l.b16 %v1559
      %v1638 = vunpack.c.h.b16 %v1559
      %v1639 = vunpack.c.l.b16 %v1560
      %v1640 = vunpack.c.h.b16 %v1560
      %v1641 = vunpack.c.l.b16 %v1561
      %v1642 = vunpack.c.h.b16 %v1561
      %v1643 = vunpack.c.l.b16 %v1562
      %v1644 = vunpack.c.h.b16 %v1562
      %v1645 = vunpack.c.l.b16 %v1563
      %v1646 = vunpack.c.h.b16 %v1563
      %v1647 = vunpack.c.l.b16 %v1564
      %v1648 = vunpack.c.h.b16 %v1564
      %v1649 = vunpack.c.l.b16 %v1565
      %v1650 = vunpack.c.h.b16 %v1565
      %v1651 = vunpack.c.l.b16 %v1566
      %v1652 = vunpack.c.h.b16 %v1566
      %v1653 = vunpack.c.l.b16 %v1567
      %v1654 = vunpack.c.h.b16 %v1567
      %v1655 = vunpack.c.l.b16 %v1568
      %v1656 = vunpack.c.h.b16 %v1568
      %v1657 = vunpack.c.l.b16 %v1569
      %v1658 = vunpack.c.h.b16 %v1569
      %v1659 = vunpack.c.l.b16 %v1570
      %v1660 = vunpack.c.h.b16 %v1570
      %v1661 = vunpack.c.l.b16 %v1571
      %v1662 = vunpack.c.h.b16 %v1571
      %v1663 = vunpack.c.l.b16 %v1572
      %v1664 = vunpack.c.h.b16 %v1572
      %v1665 = vunpack.c.l.b16 %v1573
      %v1666 = vunpack.c.h.b16 %v1573
      %v1667 = vunpack.c.l.b16 %v1574
      %v1668 = vunpack.c.h.b16 %v1574
      %v1669 = vunpack.c.l.b16 %v1575
      %v1670 = vunpack.c.h.b16 %v1575
      %v1671 = vunpack.c.l.b16 %v1576
      %v1672 = vunpack.c.h.b16 %v1576
      %v1673 = vunpack.c.l.b16 %v1577
      %v1674 = vunpack.c.h.b16 %v1577
      %v1675 = vunpack.c.l.b16 %v1578
      %v1676 = vunpack.c.h.b16 %v1578
      %v1677 = vunpack.c.l.b16 %v1579
      %v1678 = vunpack.c.h.b16 %v1579
      %v1679 = vunpack.c.l.b16 %v1580
      %v1680 = vunpack.c.h.b16 %v1580
      %v1681 = vunpack.c.l.b16 %v1581
      %v1682 = vunpack.c.h.b16 %v1581
      %v1683 = vunpack.c.l.b16 %v1582
      %v1684 = vunpack.c.h.b16 %v1582
      %v1685 = vunpack.c.l.b16 %v1583
      %v1686 = vunpack.c.h.b16 %v1583
      %v1687 = vunpack.c.l.b16 %v1584
      %v1688 = vunpack.c.h.b16 %v1584
      %v1689 = vunpack.c.l.b16 %v1585
      %v1690 = vunpack.c.h.b16 %v1585
      %v1691 = vpack.c.b16 %v1629, %v1627
      %v1692 = vpack.c.b16 %v1630, %v1628
      %v1693 = vpack.c.b16 %v1633, %v1631
      %v1694 = vpack.c.b16 %v1634, %v1632
      %v1695 = vpack.c.b16 %v1637, %v1635
      %v1696 = vpack.c.b16 %v1638, %v1636
      %v1697 = vpack.c.b16 %v1641, %v1639
      %v1698 = vpack.c.b16 %v1642, %v1640
      %v1699 = vpack.c.b16 %v1645, %v1643
      %v1700 = vpack.c.b16 %v1646, %v1644
      %v1701 = vpack.c.b16 %v1649, %v1647
      %v1702 = vpack.c.b16 %v1650, %v1648
      %v1703 = vpack.c.b16 %v1653, %v1651
      %v1704 = vpack.c.b16 %v1654, %v1652
      %v1705 = vpack.c.b16 %v1657, %v1655
      %v1706 = vpack.c.b16 %v1658, %v1656
      %v1707 = vpack.c.b16 %v1661, %v1659
      %v1708 = vpack.c.b16 %v1662, %v1660
      %v1709 = vpack.c.b16 %v1665, %v1663
      %v1710 = vpack.c.b16 %v1666, %v1664
      %v1711 = vpack.c.b16 %v1669, %v1667
      %v1712 = vpack.c.b16 %v1670, %v1668
      %v1713 = vpack.c.b16 %v1673, %v1671
      %v1714 = vpack.c.b16 %v1674, %v1672
      %v1715 = vpack.c.b16 %v1677, %v1675
      %v1716 = vpack.c.b16 %v1678, %v1676
      %v1717 = vpack.c.b16 %v1681, %v1679
      %v1718 = vpack.c.b16 %v1682, %v1680
      %v1719 = vpack.c.b16 %v1685, %v1683
      %v1720 = vpack.c.b16 %v1686, %v1684
      %v1721 = vpack.c.b16 %v1689, %v1687
      %v1722 = vpack.c.b16 %v1690, %v1688
      %1755 = vmatpush.bf16.msra.mxu0 %v1705
      %1756 = vmatpush.bf16.msra.mxu0 %v1703
      %1757 = vmatpush.bf16.msra.mxu0 %v1701
      %1758 = vmatpush.bf16.msra.mxu0 %v1699
      %1759 = vmatpush.bf16.msra.mxu0 %v1697
      %1760 = vmatpush.bf16.msra.mxu0 %v1695
      %1761 = vmatpush.bf16.msra.mxu0 %v1693
      %1762 = vmatpush.bf16.msra.mxu0 %v1691
      %1763 = vmatmul.bf16.gmra.mxu0 %v1588
      %v1764 = vpop.f32.mrf.mxu0
      %v1765 = vadd.f32 %v1591, %v1764
      %v1766 = vpop.f32.mrf.mxu0
      %v1767 = vadd.f32 %v1591, %v1766
      %1768 = vdwg.mxu0
      %1769 = vmatpush.bf16.msra.mxu0 %v1721
      %1770 = vmatpush.bf16.msra.mxu0 %v1719
      %1771 = vmatpush.bf16.msra.mxu0 %v1717
      %1772 = vmatpush.bf16.msra.mxu0 %v1715
      %1773 = vmatpush.bf16.msra.mxu0 %v1713
      %1774 = vmatpush.bf16.msra.mxu0 %v1711
      %1775 = vmatpush.bf16.msra.mxu0 %v1709
      %1776 = vmatpush.bf16.msra.mxu0 %v1707
      %1777 = vmatmul.bf16.gmra.mxu0 %v1589
      %v1778 = vpop.f32.mrf.mxu0
      %v1779 = vadd.f32 %v1765, %v1778
      %v1780 = vpop.f32.mrf.mxu0
      %v1781 = vadd.f32 %v1767, %v1780
      %1782 = vdwg.mxu0
      %1783 = vmatpush.bf16.msra.mxu0 %v1706
      %1784 = vmatpush.bf16.msra.mxu0 %v1704
      %1785 = vmatpush.bf16.msra.mxu0 %v1702
      %1786 = vmatpush.bf16.msra.mxu0 %v1700
      %1787 = vmatpush.bf16.msra.mxu0 %v1698
      %1788 = vmatpush.bf16.msra.mxu0 %v1696
      %1789 = vmatpush.bf16.msra.mxu0 %v1694
      %1790 = vmatpush.bf16.msra.mxu0 %v1692
      %1791 = vmatmul.bf16.gmra.mxu0 %v1588
      %v1792 = vpop.f32.mrf.mxu0
      %v1793 = vadd.f32 %v1592, %v1792
      %v1794 = vpop.f32.mrf.mxu0
      %v1795 = vadd.f32 %v1592, %v1794
      %1796 = vdwg.mxu0
      %1797 = vmatpush.bf16.msra.mxu0 %v1722
      %1798 = vmatpush.bf16.msra.mxu0 %v1720
      %1799 = vmatpush.bf16.msra.mxu0 %v1718
      %1800 = vmatpush.bf16.msra.mxu0 %v1716
      %1801 = vmatpush.bf16.msra.mxu0 %v1714
      %1802 = vmatpush.bf16.msra.mxu0 %v1712
      %1803 = vmatpush.bf16.msra.mxu0 %v1710
      %1804 = vmatpush.bf16.msra.mxu0 %v1708
      %1805 = vmatmul.bf16.gmra.mxu0 %v1589
      %v1806 = vpop.f32.mrf.mxu0
      %v1807 = vadd.f32 %v1793, %v1806
      %v1808 = vpop.f32.mrf.mxu0
      %v1809 = vadd.f32 %v1795, %v1808
      %1810 = vdwg.mxu0
      %v1811 = vmax.f32 %v1779, 0.0
      %v1812 = vmax.f32 %v1807, 0.0
      %v1813 = vmax.f32 %v1781, 0.0
      %v1814 = vmax.f32 %v1809, 0.0
      %v1815 = vadd.f32 %v1287, %v1811
      %v1816 = vadd.f32 %v1288, %v1812
      %v1817 = vadd.f32 %v1289, %v1813
      %v1818 = vadd.f32 %v1290, %v1814
      %v1819 = vpack.c.bf16 %v1817, %v1815
      %v1820 = vpack.c.bf16 %v1818, %v1816
      %v1821 = vld [vmem:[%s8] sm:$0xf]
      %v1822 = vld [vmem:[%s8 + $0x4] sm:$0xf]
      %v1823 = vld [vmem:[%s8 + $0x8] sm:$0xf]
      %v1824 = vld [vmem:[%s8 + $0xc] sm:$0xf]
      %v1825 = vld [vmem:[%s8 + $0x10] sm:$0xf]
      %v1826 = vld [vmem:[%s8 + $0x14] sm:$0xf]
      %v1827 = vld [vmem:[%s8 + $0x18] sm:$0xf]
      %v1828 = vld [vmem:[%s8 + $0x1c] sm:$0xf]
      %v1829 = vld [vmem:[%s8 + $0x20] sm:$0xf]
      %v1830 = vld [vmem:[%s8 + $0x24] sm:$0xf]
      %v1831 = vld [vmem:[%s8 + $0x28] sm:$0xf]
      %v1832 = vld [vmem:[%s8 + $0x2c] sm:$0xf]
      %v1833 = vld [vmem:[%s8 + $0x30] sm:$0xf]
      %v1834 = vld [vmem:[%s8 + $0x34] sm:$0xf]
      %v1835 = vld [vmem:[%s8 + $0x38] sm:$0xf]
      %v1836 = vld [vmem:[%s8 + $0x3c] sm:$0xf]
      %v1837 = vld [vmem:[%s8 + $0x40] sm:$0xf]
      %v1838 = vld [vmem:[%s8 + $0x44] sm:$0xf]
      %v1839 = vld [vmem:[%s8 + $0x48] sm:$0xf]
      %v1840 = vld [vmem:[%s8 + $0x4c] sm:$0xf]
      %v1841 = vld [vmem:[%s8 + $0x50] sm:$0xf]
      %v1842 = vld [vmem:[%s8 + $0x54] sm:$0xf]
      %v1843 = vld [vmem:[%s8 + $0x58] sm:$0xf]
      %v1844 = vld [vmem:[%s8 + $0x5c] sm:$0xf]
      %v1845 = vld [vmem:[%s8 + $0x60] sm:$0xf]
      %v1846 = vld [vmem:[%s8 + $0x64] sm:$0xf]
      %v1847 = vld [vmem:[%s8 + $0x68] sm:$0xf]
      %v1848 = vld [vmem:[%s8 + $0x6c] sm:$0xf]
      %v1849 = vld [vmem:[%s8 + $0x70] sm:$0xf]
      %v1850 = vld [vmem:[%s8 + $0x74] sm:$0xf]
      %v1851 = vld [vmem:[%s8 + $0x78] sm:$0xf]
      %v1852 = vld [vmem:[%s8 + $0x7c] sm:$0xf]
      %v1853 = vmax.f32 %v1815, %v1816
      %v1854 = vmax.f32 %v1817, %v1818
      %1857 = vrot.lane.b32.xlu0 %v1853, 64
      %v1858 = vpop.permute.xlu0 %1857
      %1859 = vrot.lane.b32.xlu0 %v1854, 64
      %v1860 = vpop.permute.xlu0 %1859
      %v1863 = vmax.f32 %v1853, %v1858
      %v1864 = vmax.f32 %v1854, %v1860
      %1867 = vrot.lane.b32.xlu0 %v1863, 96
      %v1868 = vpop.permute.xlu0 %1867
      %1869 = vrot.lane.b32.xlu0 %v1864, 96
      %v1870 = vpop.permute.xlu0 %1869
      %v1873 = vmax.f32 %v1863, %v1868
      %v1874 = vmax.f32 %v1864, %v1870
      %v1875 = vpack.c.bf16 %v1874, %v1873
      %v1876 = vld [vmem:[%s9] sm:$0xf]
      %v1877 = vld [vmem:[%s9 + $0x4] sm:$0xf]
      %v1878 = vld [vmem:[%s9 + $0x8] sm:$0xf]
      %v1879 = vld [vmem:[%s9 + $0xc] sm:$0xf]
      %v1884 = vunpack.c.l.b16 %v1876
      %v1885 = vunpack.c.l.b16 %v1877
      %v1886 = vunpack.c.l.b16 %v1878
      %v1887 = vunpack.c.l.b16 %v1879
      %v1888 = vpack.c.b16 %v1885, %v1884
      %v1889 = vpack.c.b16 %v1887, %v1886
      %vm1892 = vcmask 261120
      %v1894 = vsel %vm1892, %v1875, 0
      %1896 = vmatpush.bf16.msra.mxu0 0
      %1897 = vmatpush.bf16.msra.mxu0 0
      %1898 = vmatpush.bf16.msra.mxu0 0
      %1899 = vmatpush.bf16.msra.mxu0 0
      %1900 = vmatpush.bf16.msra.mxu0 0
      %1901 = vmatpush.bf16.msra.mxu0 0
      %1902 = vmatpush.bf16.msra.mxu0 %v1889
      %1903 = vmatpush.bf16.msra.mxu0 %v1888
      %1904 = vmatmul.bf16.gmra.mxu0 %v1894
      %v1905 = vpop.f32.mrf.mxu0
      %v1906 = vadd.f32 0.0, %v1905
      %v1907 = vpop.f32.mrf.mxu0
      %v1908 = vadd.f32 0.0, %v1907
      %1909 = vdwg.mxu0
      %v1942 = vunpack.c.l.b16 %v1821
      %v1943 = vunpack.c.l.b16 %v1822
      %v1944 = vunpack.c.l.b16 %v1823
      %v1945 = vunpack.c.l.b16 %v1824
      %v1946 = vunpack.c.l.b16 %v1825
      %v1947 = vunpack.c.l.b16 %v1826
      %v1948 = vunpack.c.l.b16 %v1827
      %v1949 = vunpack.c.l.b16 %v1828
      %v1950 = vunpack.c.l.b16 %v1829
      %v1951 = vunpack.c.l.b16 %v1830
      %v1952 = vunpack.c.l.b16 %v1831
      %v1953 = vunpack.c.l.b16 %v1832
      %v1954 = vunpack.c.l.b16 %v1833
      %v1955 = vunpack.c.l.b16 %v1834
      %v1956 = vunpack.c.l.b16 %v1835
      %v1957 = vunpack.c.l.b16 %v1836
      %v1958 = vunpack.c.l.b16 %v1837
      %v1959 = vunpack.c.l.b16 %v1838
      %v1960 = vunpack.c.l.b16 %v1839
      %v1961 = vunpack.c.l.b16 %v1840
      %v1962 = vunpack.c.l.b16 %v1841
      %v1963 = vunpack.c.l.b16 %v1842
      %v1964 = vunpack.c.l.b16 %v1843
      %v1965 = vunpack.c.l.b16 %v1844
      %v1966 = vunpack.c.l.b16 %v1845
      %v1967 = vunpack.c.l.b16 %v1846
      %v1968 = vunpack.c.l.b16 %v1847
      %v1969 = vunpack.c.l.b16 %v1848
      %v1970 = vunpack.c.l.b16 %v1849
      %v1971 = vunpack.c.l.b16 %v1850
      %v1972 = vunpack.c.l.b16 %v1851
      %v1973 = vunpack.c.l.b16 %v1852
      %v1974 = vpack.c.b16 %v1943, %v1942
      %v1975 = vpack.c.b16 %v1945, %v1944
      %v1976 = vpack.c.b16 %v1947, %v1946
      %v1977 = vpack.c.b16 %v1949, %v1948
      %v1978 = vpack.c.b16 %v1951, %v1950
      %v1979 = vpack.c.b16 %v1953, %v1952
      %v1980 = vpack.c.b16 %v1955, %v1954
      %v1981 = vpack.c.b16 %v1957, %v1956
      %v1982 = vpack.c.b16 %v1959, %v1958
      %v1983 = vpack.c.b16 %v1961, %v1960
      %v1984 = vpack.c.b16 %v1963, %v1962
      %v1985 = vpack.c.b16 %v1965, %v1964
      %v1986 = vpack.c.b16 %v1967, %v1966
      %v1987 = vpack.c.b16 %v1969, %v1968
      %v1988 = vpack.c.b16 %v1971, %v1970
      %v1989 = vpack.c.b16 %v1973, %v1972
      %2006 = vmatpush.bf16.msra.mxu0 %v1981
      %2007 = vmatpush.bf16.msra.mxu0 %v1980
      %2008 = vmatpush.bf16.msra.mxu0 %v1979
      %2009 = vmatpush.bf16.msra.mxu0 %v1978
      %2010 = vmatpush.bf16.msra.mxu0 %v1977
      %2011 = vmatpush.bf16.msra.mxu0 %v1976
      %2012 = vmatpush.bf16.msra.mxu0 %v1975
      %2013 = vmatpush.bf16.msra.mxu0 %v1974
      %2014 = vmatmul.bf16.gmra.mxu0 %v1819
      %v2015 = vpop.f32.mrf.mxu0
      %v2016 = vadd.f32 %v1906, %v2015
      %v2017 = vpop.f32.mrf.mxu0
      %v2018 = vadd.f32 %v1908, %v2017
      %2019 = vdwg.mxu0
      %2020 = vmatpush.bf16.msra.mxu0 %v1989
      %2021 = vmatpush.bf16.msra.mxu0 %v1988
      %2022 = vmatpush.bf16.msra.mxu0 %v1987
      %2023 = vmatpush.bf16.msra.mxu0 %v1986
      %2024 = vmatpush.bf16.msra.mxu0 %v1985
      %2025 = vmatpush.bf16.msra.mxu0 %v1984
      %2026 = vmatpush.bf16.msra.mxu0 %v1983
      %2027 = vmatpush.bf16.msra.mxu0 %v1982
      %2028 = vmatmul.bf16.gmra.mxu0 %v1820
      %v2029 = vpop.f32.mrf.mxu0
      %v2030 = vadd.f32 %v2016, %v2029
      %v2031 = vpop.f32.mrf.mxu0
      %v2032 = vadd.f32 %v2018, %v2031
      %2033 = vdwg.mxu0
      %v2034 = vld [vmem:[%s488] sm:$0xf]
      %v2035 = vld [vmem:[%s488 + $0x4] sm:$0xf]
      %v2036 = vld [vmem:[%s10] sm:$0xf]
      %v2037 = vld [vmem:[%s10 + $0x4] sm:$0xf]
      %v2038 = vld [vmem:[%s10 + $0x8] sm:$0xf]
      %v2039 = vld [vmem:[%s10 + $0xc] sm:$0xf]
      %v2042 = vunpack.c.l.b16 %v2034
      %v2043 = vunpack.c.l.b16 %v2035
      %v2044 = vpack.c.b16 %v2043, %v2042
      %v2049 = vunpack.c.l.b16 %v2036
      %v2050 = vunpack.c.l.b16 %v2037
      %v2051 = vunpack.c.l.b16 %v2038
      %v2052 = vunpack.c.l.b16 %v2039
      %v2053 = vpack.c.b16 %v2050, %v2049
      %v2054 = vpack.c.b16 %v2052, %v2051
      %v2058 = vsel %vm1892, %v2044, 0
      %2060 = vmatpush.bf16.msra.mxu0 0
      %2061 = vmatpush.bf16.msra.mxu0 0
      %2062 = vmatpush.bf16.msra.mxu0 0
      %2063 = vmatpush.bf16.msra.mxu0 0
      %2064 = vmatpush.bf16.msra.mxu0 0
      %2065 = vmatpush.bf16.msra.mxu0 0
      %2066 = vmatpush.bf16.msra.mxu0 %v2054
      %2067 = vmatpush.bf16.msra.mxu0 %v2053
      %2068 = vmatmul.bf16.gmra.mxu0 %v2058
      %v2069 = vpop.f32.mrf.mxu0
      %v2070 = vadd.f32 0.0, %v2069
      %v2071 = vpop.f32.mrf.mxu0
      %v2072 = vadd.f32 0.0, %v2071
      %2073 = vdwg.mxu0
      %v2074 = vadd.f32 %v2030, %v2070
      %v2075 = vadd.f32 %v2032, %v2072
      %v2076 = vld [vmem:[%s11] sm:$0x1]
      %v2078 = vperm.slane %v2076, 0
      %v2080 = vadd.f32 %v2074, %v2078
      %v2081 = vadd.f32 %v2075, %v2078
      %v2082 = vmax.f32 %v2080, 0.0
      %v2083 = vmax.f32 %v2081, 0.0
      %v2084 = vpack.c.bf16 %v2083, %v2082
      %v2085 = vld [vmem:[%s12] sm:$0xf]
      %v2086 = vld [vmem:[%s12 + $0x4] sm:$0xf]
      %v2087 = vld [vmem:[%s12 + $0x8] sm:$0xf]
      %v2088 = vld [vmem:[%s12 + $0xc] sm:$0xf]
      %v2089 = vld [vmem:[%s13] sm:$0x1]
      %v2091 = vperm.slane %v2089, 0
      %v2097 = vunpack.c.l.b16 %v2085
      %v2098 = vunpack.c.l.b16 %v2086
      %v2099 = vunpack.c.l.b16 %v2087
      %v2100 = vunpack.c.l.b16 %v2088
      %v2101 = vpack.c.b16 %v2098, %v2097
      %v2102 = vpack.c.b16 %v2100, %v2099
      %v2106 = vsel %vm1892, %v2084, 0
      %2108 = vmatpush.bf16.msra.mxu0 0
      %2109 = vmatpush.bf16.msra.mxu0 0
      %2110 = vmatpush.bf16.msra.mxu0 0
      %2111 = vmatpush.bf16.msra.mxu0 0
      %2112 = vmatpush.bf16.msra.mxu0 0
      %2113 = vmatpush.bf16.msra.mxu0 0
      %2114 = vmatpush.bf16.msra.mxu0 %v2102
      %2115 = vmatpush.bf16.msra.mxu0 %v2101
      %2116 = vmatmul.bf16.gmra.mxu0 %v2106
      %v2117 = vpop.f32.mrf.mxu0
      %v2118 = vadd.f32 %v2091, %v2117
      %v2119 = vpop.f32.mrf.mxu0
      %v2120 = vadd.f32 %v2091, %v2119
      %2121 = vdwg.mxu0
      %2122 = vst [vmem:[%s494] sm:$0xff] %v2118
      %2123 = vst [vmem:[%s494 + $0x8] sm:$0xff] %v2120
      %s2124 = smul.u32 2, %s25
      %p2125 = scmp.lt.s32.totalorder %s2124, 3
      %s2126 = scalar_select %p2125, %s2124, 3
      %s2127 = smul.addr %s2126, 8
      %s2128 = scalar_lea.vmem %s14, %s2127
      // Predicated region
      $region77: #{pose_refine_forward.1} parent=75 // pred_check
        %p2129 = pneg %p347
      $region78: #{pose_refine_forward.1} parent=75 // pred_check_branch
        %2131 = sbr.rel (%p2129) target = $region80
      $region79: #{pose_refine_forward.1} parent=75 // pred_region
        %s2132 = smul.u32 2, %s25
      $region80: #{pose_refine_forward.1} parent=75 // pred_fallthru
        _
    $region76: #{pose_refine_forward.1} parent=5 // pred_fallthru
      _
    %p2133 = scmp.le.s32.totalorder 2, %s20
    // Predicated region
    $region81: #{pose_refine_forward.1} parent=5 // pred_check
      %p2134 = pneg %p2133
    $region82: #{pose_refine_forward.1} parent=5 // pred_check_branch
      %2136 = sbr.rel (%p2134) target = $region84
    $region83: #{pose_refine_forward.1} parent=5 // pred_region
      %s2137 = ssub.s32 %s20, 2
      // Predicated region
      $region85: #{pose_refine_forward.1} parent=83 // pred_check
        %p2138 = pneg %p353
      $region86: #{pose_refine_forward.1} parent=83 // pred_check_branch
        %2140 = sbr.rel (%p2138) target = $region88
      $region87: #{pose_refine_forward.1} parent=83 // pred_region
        %s2141 = smul.u32 2, %s26
        %p2142 = scmp.lt.s32.totalorder %s2141, 3
        %s2143 = scalar_select %p2142, %s2141, 3
        %s2144 = smul.addr %s2143, 8
        %s2145 = scalar_lea.vmem %s14, %s2144
      $region88: #{pose_refine_forward.1} parent=83 // pred_fallthru
        _
    $region84: #{pose_refine_forward.1} parent=5 // pred_fallthru
      _
  $region6: #{pose_refine_forward.1} parent=0 // loop_footer
    %s24 = sadd.s32 1, %s20
  $region7: #{pose_refine_forward.1} parent=0 // loop_footer_branch
    %19 = sbr.rel target = $region3
  $region8: #{pose_refine_forward.1} parent=0 // loop_exit
    _

</llo_original>
